<compile_context>
chip_gen: v7x
topology: tpu7x:2x2x1
jax: 0.10.0
libtpu: 0.0.40
codegen_flags: <defaults>
</compile_context>

<pallas_src>
import math

import numpy as np
import jax
import jax.numpy as jnp
from jax.experimental import pallas as pl
from jax.experimental.pallas import tpu as pltpu


# --------------------------- layout / call helpers -------------------------- #

_BLOCK_TARGET_BYTES = 512 * 1024   # per tensor per block (6 streams * 2 bufs fits v5e)
_MAX_LANE_COLS = 65536


def _lane_view(x):
    """Widest lane-dense 2-D view: cols a large multiple of 128, rows % 8 == 0."""
    total = int(x.size)
    cap = min(total // 8, _MAX_LANE_COLS)
    c = (cap // 128) * 128
    while c >= 128:
        if total % (c * 8) == 0:
            return x.reshape(total // c, c)
        c -= 128
    return x.reshape(-1, x.shape[-1])


def _pick_block_rows(rows, cols, itemsize):
    if rows <= 8 or rows % 8 != 0:
        return rows
    max_rows = max(8, (_BLOCK_TARGET_BYTES // (cols * itemsize)) // 8 * 8)
    if rows <= max_rows:
        return rows
    best = 8
    r = 16
    while r <= max_rows:
        if rows % r == 0:
            best = r
        r += 8
    return best


def _elemwise_call(kernel, tensors, num_out, *, aliases=None):
    """Fused elementwise pallas_call over a shared lane-dense 2-D state view."""
    rows, cols = tensors[0].shape
    dtype = tensors[0].dtype
    block_rows = _pick_block_rows(rows, cols, dtype.itemsize)
    grid = (rows // block_rows,)
    spec = pl.BlockSpec((block_rows, cols), lambda i: (i, 0))
    out_shape = tuple(jax.ShapeDtypeStruct((rows, cols), dtype)
                      for _ in range(num_out))
    out_specs = tuple(spec for _ in range(num_out))
    if num_out == 1:
        out_shape, out_specs = out_shape[0], out_specs[0]
    return pl.pallas_call(
        kernel,
        grid=grid,
        out_shape=out_shape,
        in_specs=[spec] * len(tensors),
        out_specs=out_specs,
        input_output_aliases=aliases or {},
        compiler_params=pltpu.CompilerParams(
            dimension_semantics=("parallel",)),
    )(*tensors)


# ------------------------------ Pallas kernels ------------------------------ #

def _make_half1_kernel(a1, b1, cin_mid):
    """x_mid = a1*x + b1*x_pred ; x_in_mid = c_in(sigma_mid) * x_mid."""
    a1, b1, cin_mid = float(a1), float(b1), float(cin_mid)

    def kernel(x_ref, xp_ref, xmid_ref, xin_ref):
        x_mid = x_ref[...] * a1 + xp_ref[...] * b1
        xmid_ref[...] = x_mid
        xin_ref[...] = x_mid * cin_mid

    return kernel


def _make_half2_kernel(cx, a2, b2, s_up, cin_next):
    """x_next = cx*x + a2*x_mid + b2*x_pred_mid + sigma_up*z (+ c_in*x_next)."""
    cx, a2, b2, s_up = float(cx), float(a2), float(b2), float(s_up)

    def _combine(x_ref, xmid_ref, xpmid_ref, z_ref):
        x = x_ref[...]
        if cx != 1.0:
            x = x * cx
        return x + xmid_ref[...] * a2 + xpmid_ref[...] * b2 + z_ref[...] * s_up

    if cin_next is None:
        def kernel(x_ref, xmid_ref, xpmid_ref, z_ref, xnext_ref):
            xnext_ref[...] = _combine(x_ref, xmid_ref, xpmid_ref, z_ref)
        return kernel

    cin = float(cin_next)

    def kernel(x_ref, xmid_ref, xpmid_ref, z_ref, xnext_ref, xin_ref):
        x_next = _combine(x_ref, xmid_ref, xpmid_ref, z_ref)
        xnext_ref[...] = x_next
        xin_ref[...] = x_next * cin

    return kernel


# --------------------- host-side (float64) scalar folding ------------------- #

def _kdiff_scales(sigma, sigma_data):
    s2, d2 = sigma * sigma, sigma_data * sigma_data
    c_skip = d2 / (s2 + d2)
    c_out = sigma * sigma_data / math.sqrt(s2 + d2)
    c_in = 1.0 / math.sqrt(s2 + d2)
    c_noise = 0.25 * math.log(sigma)
    return c_skip, c_out, c_in, c_noise


def _step_coeffs(sigma, sigma_next, rho, sigma_data):
    sigma_up = math.sqrt(max(0.0, sigma_next ** 2 * (sigma ** 2 - sigma_next ** 2)
                             / sigma ** 2))
    sigma_down = math.sqrt(max(0.0, sigma_next ** 2 - sigma_up ** 2))
    sigma_mid = ((sigma ** (1.0 / rho) + sigma_down ** (1.0 / rho)) / 2.0) ** rho

    c_skip_s, c_out_s, c_in_s, c_noise_s = _kdiff_scales(sigma, sigma_data)
    c_skip_m, c_out_m, c_in_m, c_noise_m = _kdiff_scales(sigma_mid, sigma_data)

    k1 = (sigma_mid - sigma) / sigma
    k2 = (sigma_down - sigma) / sigma_mid
    return dict(
        a1=1.0 + k1 * (1.0 - c_skip_s), b1=-k1 * c_out_s,
        a2=k2 * (1.0 - c_skip_m), b2=-k2 * c_out_m,
        sigma_up=sigma_up,
        c_in_sigma=c_in_s, c_in_mid=c_in_m,
        c_noise_sigma=c_noise_s, c_noise_mid=c_noise_m,
    )


# ------------------------------- ADPM2 sampler ------------------------------ #

def adpm2_sample(noise, step_noise, *, net, sigma_data, sigmas, num_steps,
                 rho=1.0):
    """Pallas ADPM2Sampler.forward specialized to a KDiffusion denoiser.

    `sigmas` must be a host-side numpy array / sequence (compile-time constant):
    all schedule / conditioning scalars are folded on the host and baked into
    the kernels.  `net(x, c_noise)` is the raw denoising network.
    """
    shape = noise.shape
    sig = [float(s) for s in np.asarray(sigmas, dtype=np.float64)]
    if num_steps < 2:
        return noise * sig[0]

    x = _lane_view(noise)        # current state (holds raw noise at step 0)
    x_scale = sig[0]             # sigmas[0]*noise folded into step-0 coeffs
    x_in = None                  # c_in(sigma_i) * x, input for the next net call

    for i in range(num_steps - 1):
        c = _step_coeffs(sig[i], sig[i + 1], rho, sigma_data)
        last = (i == num_steps - 2)

        if x_in is None:
            # Step 0 only: fold sigmas[0]*c_in(sigma_0) into one jnp scale
            # (XLA fuses it into the net prologue).
            x_in = x * (x_scale * c["c_in_sigma"])

        # Denoise net at sigma_i (plain JAX: arbitrary user network).
        xp = _lane_view(net(x_in.reshape(shape), c["c_noise_sigma"]))

        # Half step 1 (fused): x_mid = a1*x + b1*x_pred ; emit c_in_mid*x_mid.
        k1 = _make_half1_kernel(c["a1"] * x_scale, c["b1"], c["c_in_mid"])
        x_mid, x_in_mid = _elemwise_call(k1, (x, xp), num_out=2,
                                         aliases={1: 0})   # x_mid reuses xp buf

        # Denoise net at sigma_mid.
        xp_mid = _lane_view(net(x_in_mid.reshape(shape), c["c_noise_mid"]))

        # Half step 2 + ancestral noise (fused); emit next net input unless last.
        z = _lane_view(step_noise[i])
        cin_next = None if last else _kdiff_scales(sig[i + 1], sigma_data)[2]
        k2 = _make_half2_kernel(x_scale, c["a2"], c["b2"], c["sigma_up"],
                                cin_next)
        if last:
            x = _elemwise_call(k2, (x, x_mid, xp_mid, z), num_out=1,
                               aliases={0: 0})              # x_next reuses x buf
        else:
            x, x_in = _elemwise_call(k2, (x, x_mid, xp_mid, z), num_out=2,
                                     aliases={0: 0})
        x_scale = 1.0

    return x.reshape(shape)


# ------------------------------ pure-JAX reference -------------------------- #

def adpm2_sample_ref(noise, fn, sigmas, num_steps, *, rho=1.0, step_noise=None):
    """Pure-JAX reference mirroring the PyTorch ADPM2Sampler exactly."""
    x = sigmas[0] * noise
    for i in range(num_steps - 1):
        sigma, sigma_next = sigmas[i], sigmas[i + 1]
        sigma_up = jnp.sqrt(sigma_next ** 2 * (sigma ** 2 - sigma_next ** 2)
                            / sigma ** 2)
        sigma_down = jnp.sqrt(sigma_next ** 2 - sigma_up ** 2)
        sigma_mid = ((sigma ** (1.0 / rho) + sigma_down ** (1.0 / rho)) / 2.0
                     ) ** rho
        d = (x - fn(x, sigma=sigma)) / sigma
        x_mid = x + d * (sigma_mid - sigma)
        d_mid = (x_mid - fn(x_mid, sigma=sigma_mid)) / sigma_mid
        x = x + d_mid * (sigma_down - sigma)
        x = x + step_noise[i] * sigma_up
    return x


# --------------------------- harness helper pieces --------------------------- #

def karras_schedule(num_steps, sigma_min, sigma_max, rho=7.0):
    """Host-side (numpy float64) Karras sigma schedule with trailing 0."""
    rho_inv = 1.0 / rho
    steps = np.arange(num_steps, dtype=np.float64)
    sig = (sigma_max ** rho_inv
           + steps / (num_steps - 1) * (sigma_min ** rho_inv - sigma_max ** rho_inv)
           ) ** rho
    return np.concatenate([sig, [0.0]])


def make_net():
    """Tiny deterministic stand-in for KDiffusion's `net` (runs as plain JAX)."""
    def net(x_in, c_noise):
        return jnp.tanh(x_in) * 0.5 + 0.1 * jnp.sin(c_noise)
    return net


def make_denoise_fn(net, sigma_data):
    """KDiffusion.denoise_fn (used by the reference path)."""
    def fn(x, *, sigma):
        c_skip = sigma_data ** 2 / (sigma ** 2 + sigma_data ** 2)
        c_out = sigma * sigma_data * (sigma_data ** 2 + sigma ** 2) ** (-0.5)
        c_in = (sigma ** 2 + sigma_data ** 2) ** (-0.5)
        c_noise = jnp.log(sigma) * 0.25
        return c_skip * x + c_out * net(c_in * x, c_noise)
    return fn


if __name__ == "__main__":
    key = jax.random.PRNGKey(0)
    k_noise, k_steps = jax.random.split(key)

    # Small audio-diffusion-like shape; total 2048 f32 -> lane view (8, 256).
    B, C, T = 2, 8, 128
    sched_steps = 8
    rho = 1.0            # ADPM2Sampler default
    sigma_data = 0.5

    # styletts2 inference settings: KarrasSchedule(1e-4, 3.0, rho=9.0).
    sigmas_np = karras_schedule(sched_steps, sigma_min=1e-4, sigma_max=3.0,
                                rho=9.0)                 # 9 sigmas incl. final 0
    # Consume the whole schedule (final step goes to sigma = 0); the forward
    # itself still loops num_steps - 1 times exactly like the PyTorch module.
    num_steps = int(sigmas_np.shape[0])

    noise = jax.random.normal(k_noise, (B, C, T), dtype=jnp.float32)
    step_noise = jax.random.normal(k_steps, (num_steps - 1, B, C, T),
                                   dtype=jnp.float32)

    net = make_net()

    fused = jax.jit(lambda n, z: adpm2_sample(
        n, z, net=net, sigma_data=sigma_data, sigmas=sigmas_np,
        num_steps=num_steps, rho=rho))
    out = jax.block_until_ready(fused(noise, step_noise))

    fn = make_denoise_fn(net, sigma_data)
    sigmas_f32 = jnp.asarray(sigmas_np, dtype=jnp.float32)
    ref_fn = jax.jit(lambda n, z: adpm2_sample_ref(
        n, fn, sigmas_f32, num_steps, rho=rho, step_noise=z))
    ref = jax.block_until_ready(ref_fn(noise, step_noise))

    assert out.shape == (B, C, T)
    assert out.dtype == jnp.float32
    assert bool(jnp.all(jnp.isfinite(out)))
    max_err = float(jnp.max(jnp.abs(out - ref)))
    assert jnp.allclose(out, ref, rtol=1e-4, atol=1e-4), max_err

    print("KERNEL_OK")
</pallas_src>

<mosaic_0001>
module attributes {stable_mosaic.version = 11 : i64} {
  func.func @kernel(%arg0: i32, %arg1: memref<8x256xf32, #tpu.memory_space<vmem>>, %arg2: memref<8x256xf32, #tpu.memory_space<vmem>>, %arg3: memref<8x256xf32, #tpu.memory_space<vmem>>, %arg4: memref<8x256xf32, #tpu.memory_space<vmem>>) attributes {dimension_semantics = [#tpu.dimension_semantics<parallel>], iteration_bounds = array<i64: 1>, scalar_prefetch = 0 : i64, scratch_operands = 0 : i64, tpu.core_type = #tpu.core_type<tc>, window_params = [{transform_indices = @transform_0, window_bounds = array<i64: 8, 256>}, {transform_indices = @transform_1, window_bounds = array<i64: 8, 256>}, {transform_indices = @transform_2, window_bounds = array<i64: 8, 256>}, {transform_indices = @transform_3, window_bounds = array<i64: 8, 256>}]} {
    %c0 = arith.constant 0 : index
    %c0_0 = arith.constant 0 : index
    %0 = vector.load %arg1[%c0, %c0_0] : memref<8x256xf32, #tpu.memory_space<vmem>>, vector<8x256xf32>
    %cst = arith.constant 1.77119648 : f32
    %1 = vector.broadcast %cst : f32 to vector<8x256xf32>
    %2 = arith.mulf %0, %1 : vector<8x256xf32>
    %c0_1 = arith.constant 0 : index
    %c0_2 = arith.constant 0 : index
    %3 = vector.load %arg2[%c0_1, %c0_2] : memref<8x256xf32, #tpu.memory_space<vmem>>, vector<8x256xf32>
    %cst_3 = arith.constant 0.207625553 : f32
    %4 = vector.broadcast %cst_3 : f32 to vector<8x256xf32>
    %5 = arith.mulf %3, %4 : vector<8x256xf32>
    %6 = arith.addf %2, %5 : vector<8x256xf32>
    %c0_4 = arith.constant 0 : index
    %c0_5 = arith.constant 0 : index
    %7 = vector.load %arg3[%c0_4, %c0_5] : memref<8x256xf32, #tpu.memory_space<vmem>>, vector<8x256xf32>
    tpu.vector_store %arg3[%c0_4, %c0_5], %6 {strides = array<i32>} : memref<8x256xf32, #tpu.memory_space<vmem>>, vector<8x256xf32>,
    %cst_6 = arith.constant 0.553222239 : f32
    %8 = vector.broadcast %cst_6 : f32 to vector<8x256xf32>
    %9 = arith.mulf %6, %8 : vector<8x256xf32>
    %c0_7 = arith.constant 0 : index
    %c0_8 = arith.constant 0 : index
    %10 = vector.load %arg4[%c0_7, %c0_8] : memref<8x256xf32, #tpu.memory_space<vmem>>, vector<8x256xf32>
    tpu.vector_store %arg4[%c0_7, %c0_8], %9 {strides = array<i32>} : memref<8x256xf32, #tpu.memory_space<vmem>>, vector<8x256xf32>,
    return
  }
  func.func @transform_0(%arg0: i32) -> (i32, i32) {
    %c0_i32 = arith.constant 0 : i32
    %c0_i32_0 = arith.constant 0 : i32
    return %arg0, %c0_i32 : i32, i32
  }
  func.func @transform_1(%arg0: i32) -> (i32, i32) {
    %c0_i32 = arith.constant 0 : i32
    %c0_i32_0 = arith.constant 0 : i32
    return %arg0, %c0_i32 : i32, i32
  }
  func.func @transform_2(%arg0: i32) -> (i32, i32) {
    %c0_i32 = arith.constant 0 : i32
    %c0_i32_0 = arith.constant 0 : i32
    return %arg0, %c0_i32 : i32, i32
  }
  func.func @transform_3(%arg0: i32) -> (i32, i32) {
    %c0_i32 = arith.constant 0 : i32
    %c0_i32_0 = arith.constant 0 : i32
    return %arg0, %c0_i32 : i32, i32
  }
}

module attributes {stable_mosaic.version = 11 : i64} {
  func.func @kernel(%arg0: i32, %arg1: memref<8x256xf32, #tpu.memory_space<vmem>>, %arg2: memref<8x256xf32, #tpu.memory_space<vmem>>, %arg3: memref<8x256xf32, #tpu.memory_space<vmem>>, %arg4: memref<8x256xf32, #tpu.memory_space<vmem>>) attributes {dimension_semantics = [#tpu.dimension_semantics<parallel>], iteration_bounds = array<i64: 1>, scalar_prefetch = 0 : i64, scratch_operands = 0 : i64, tpu.core_type = #tpu.core_type<tc>, window_params = [{transform_indices = @transform_0, window_bounds = array<i64: 8, 256>}, {transform_indices = @transform_1, window_bounds = array<i64: 8, 256>}, {transform_indices = @transform_2, window_bounds = array<i64: 8, 256>}, {transform_indices = @transform_3, window_bounds = array<i64: 8, 256>}]} {
    %c0 = arith.constant 0 : index
    %c0_0 = arith.constant 0 : index
    %0 = vector.load %arg1[%c0, %c0_0] : memref<8x256xf32, #tpu.memory_space<vmem>>, vector<8x256xf32>
    %cst = arith.constant 0.629172146 : f32
    %1 = vector.broadcast %cst : f32 to vector<8x256xf32>
    %2 = arith.mulf %0, %1 : vector<8x256xf32>
    %c0_1 = arith.constant 0 : index
    %c0_2 = arith.constant 0 : index
    %3 = vector.load %arg2[%c0_1, %c0_2] : memref<8x256xf32, #tpu.memory_space<vmem>>, vector<8x256xf32>
    %cst_3 = arith.constant 0.201049075 : f32
    %4 = vector.broadcast %cst_3 : f32 to vector<8x256xf32>
    %5 = arith.mulf %3, %4 : vector<8x256xf32>
    %6 = arith.addf %2, %5 : vector<8x256xf32>
    %c0_4 = arith.constant 0 : index
    %c0_5 = arith.constant 0 : index
    %7 = vector.load %arg3[%c0_4, %c0_5] : memref<8x256xf32, #tpu.memory_space<vmem>>, vector<8x256xf32>
    tpu.vector_store %arg3[%c0_4, %c0_5], %6 {strides = array<i32>} : memref<8x256xf32, #tpu.memory_space<vmem>>, vector<8x256xf32>,
    %cst_6 = arith.constant 1.19314718 : f32
    %8 = vector.broadcast %cst_6 : f32 to vector<8x256xf32>
    %9 = arith.mulf %6, %8 : vector<8x256xf32>
    %c0_7 = arith.constant 0 : index
    %c0_8 = arith.constant 0 : index
    %10 = vector.load %arg4[%c0_7, %c0_8] : memref<8x256xf32, #tpu.memory_space<vmem>>, vector<8x256xf32>
    tpu.vector_store %arg4[%c0_7, %c0_8], %9 {strides = array<i32>} : memref<8x256xf32, #tpu.memory_space<vmem>>, vector<8x256xf32>,
    return
  }
  func.func @transform_0(%arg0: i32) -> (i32, i32) {
    %c0_i32 = arith.constant 0 : i32
    %c0_i32_0 = arith.constant 0 : i32
    return %arg0, %c0_i32 : i32, i32
  }
  func.func @transform_1(%arg0: i32) -> (i32, i32) {
    %c0_i32 = arith.constant 0 : i32
    %c0_i32_0 = arith.constant 0 : i32
    return %arg0, %c0_i32 : i32, i32
  }
  func.func @transform_2(%arg0: i32) -> (i32, i32) {
    %c0_i32 = arith.constant 0 : i32
    %c0_i32_0 = arith.constant 0 : i32
    return %arg0, %c0_i32 : i32, i32
  }
  func.func @transform_3(%arg0: i32) -> (i32, i32) {
    %c0_i32 = arith.constant 0 : i32
    %c0_i32_0 = arith.constant 0 : i32
    return %arg0, %c0_i32 : i32, i32
  }
}

module attributes {stable_mosaic.version = 11 : i64} {
  func.func @kernel(%arg0: i32, %arg1: memref<8x256xf32, #tpu.memory_space<vmem>>, %arg2: memref<8x256xf32, #tpu.memory_space<vmem>>, %arg3: memref<8x256xf32, #tpu.memory_space<vmem>>, %arg4: memref<8x256xf32, #tpu.memory_space<vmem>>, %arg5: memref<8x256xf32, #tpu.memory_space<vmem>>, %arg6: memref<8x256xf32, #tpu.memory_space<vmem>>) attributes {dimension_semantics = [#tpu.dimension_semantics<parallel>], iteration_bounds = array<i64: 1>, scalar_prefetch = 0 : i64, scratch_operands = 0 : i64, tpu.core_type = #tpu.core_type<tc>, window_params = [{transform_indices = @transform_0, window_bounds = array<i64: 8, 256>}, {transform_indices = @transform_1, window_bounds = array<i64: 8, 256>}, {transform_indices = @transform_2, window_bounds = array<i64: 8, 256>}, {transform_indices = @transform_3, window_bounds = array<i64: 8, 256>}, {transform_indices = @transform_4, window_bounds = array<i64: 8, 256>}, {transform_indices = @transform_5, window_bounds = array<i64: 8, 256>}]} {
    %c0 = arith.constant 0 : index
    %c0_0 = arith.constant 0 : index
    %0 = vector.load %arg1[%c0, %c0_0] : memref<8x256xf32, #tpu.memory_space<vmem>>, vector<8x256xf32>
    %cst = arith.constant 3.000000e+00 : f32
    %1 = vector.broadcast %cst : f32 to vector<8x256xf32>
    %2 = arith.mulf %0, %1 : vector<8x256xf32>
    %c0_1 = arith.constant 0 : index
    %c0_2 = arith.constant 0 : index
    %3 = vector.load %arg2[%c0_1, %c0_2] : memref<8x256xf32, #tpu.memory_space<vmem>>, vector<8x256xf32>
    %cst_3 = arith.constant -1.34284699 : f32
    %4 = vector.broadcast %cst_3 : f32 to vector<8x256xf32>
    %5 = arith.mulf %3, %4 : vector<8x256xf32>
    %6 = arith.addf %2, %5 : vector<8x256xf32>
    %c0_4 = arith.constant 0 : index
    %c0_5 = arith.constant 0 : index
    %7 = vector.load %arg3[%c0_4, %c0_5] : memref<8x256xf32, #tpu.memory_space<vmem>>, vector<8x256xf32>
    %cst_6 = arith.constant 0.698684812 : f32
    %8 = vector.broadcast %cst_6 : f32 to vector<8x256xf32>
    %9 = arith.mulf %7, %8 : vector<8x256xf32>
    %10 = arith.addf %6, %9 : vector<8x256xf32>
    %c0_7 = arith.constant 0 : index
    %c0_8 = arith.constant 0 : index
    %11 = vector.load %arg4[%c0_7, %c0_8] : memref<8x256xf32, #tpu.memory_space<vmem>>, vector<8x256xf32>
    %cst_9 = arith.constant 1.09434128 : f32
    %12 = vector.broadcast %cst_9 : f32 to vector<8x256xf32>
    %13 = arith.mulf %11, %12 : vector<8x256xf32>
    %14 = arith.addf %10, %13 : vector<8x256xf32>
    %c0_10 = arith.constant 0 : index
    %c0_11 = arith.constant 0 : index
    %15 = vector.load %arg5[%c0_10, %c0_11] : memref<8x256xf32, #tpu.memory_space<vmem>>, vector<8x256xf32>
    tpu.vector_store %arg5[%c0_10, %c0_11], %14 {strides = array<i32>} : memref<8x256xf32, #tpu.memory_space<vmem>>, vector<8x256xf32>,
    %cst_12 = arith.constant 0.773272812 : f32
    %16 = vector.broadcast %cst_12 : f32 to vector<8x256xf32>
    %17 = arith.mulf %14, %16 : vector<8x256xf32>
    %c0_13 = arith.constant 0 : index
    %c0_14 = arith.constant 0 : index
    %18 = vector.load %arg6[%c0_13, %c0_14] : memref<8x256xf32, #tpu.memory_space<vmem>>, vector<8x256xf32>
    tpu.vector_store %arg6[%c0_13, %c0_14], %17 {strides = array<i32>} : memref<8x256xf32, #tpu.memory_space<vmem>>, vector<8x256xf32>,
    return
  }
  func.func @transform_0(%arg0: i32) -> (i32, i32) {
    %c0_i32 = arith.constant 0 : i32
    %c0_i32_0 = arith.constant 0 : i32
    return %arg0, %c0_i32 : i32, i32
  }
  func.func @transform_1(%arg0: i32) -> (i32, i32) {
    %c0_i32 = arith.constant 0 : i32
    %c0_i32_0 = arith.constant 0 : i32
    return %arg0, %c0_i32 : i32, i32
  }
  func.func @transform_2(%arg0: i32) -> (i32, i32) {
    %c0_i32 = arith.constant 0 : i32
    %c0_i32_0 = arith.constant 0 : i32
    return %arg0, %c0_i32 : i32, i32
  }
  func.func @transform_3(%arg0: i32) -> (i32, i32) {
    %c0_i32 = arith.constant 0 : i32
    %c0_i32_0 = arith.constant 0 : i32
    return %arg0, %c0_i32 : i32, i32
  }
  func.func @transform_4(%arg0: i32) -> (i32, i32) {
    %c0_i32 = arith.constant 0 : i32
    %c0_i32_0 = arith.constant 0 : i32
    return %arg0, %c0_i32 : i32, i32
  }
  func.func @transform_5(%arg0: i32) -> (i32, i32) {
    %c0_i32 = arith.constant 0 : i32
    %c0_i32_0 = arith.constant 0 : i32
    return %arg0, %c0_i32 : i32, i32
  }
}

module attributes {stable_mosaic.version = 11 : i64} {
  func.func @kernel(%arg0: i32, %arg1: memref<8x256xf32, #tpu.memory_space<vmem>>, %arg2: memref<8x256xf32, #tpu.memory_space<vmem>>, %arg3: memref<8x256xf32, #tpu.memory_space<vmem>>, %arg4: memref<8x256xf32, #tpu.memory_space<vmem>>, %arg5: memref<8x256xf32, #tpu.memory_space<vmem>>, %arg6: memref<8x256xf32, #tpu.memory_space<vmem>>) attributes {dimension_semantics = [#tpu.dimension_semantics<parallel>], iteration_bounds = array<i64: 1>, scalar_prefetch = 0 : i64, scratch_operands = 0 : i64, tpu.core_type = #tpu.core_type<tc>, window_params = [{transform_indices = @transform_0, window_bounds = array<i64: 8, 256>}, {transform_indices = @transform_1, window_bounds = array<i64: 8, 256>}, {transform_indices = @transform_2, window_bounds = array<i64: 8, 256>}, {transform_indices = @transform_3, window_bounds = array<i64: 8, 256>}, {transform_indices = @transform_4, window_bounds = array<i64: 8, 256>}, {transform_indices = @transform_5, window_bounds = array<i64: 8, 256>}]} {
    %c0 = arith.constant 0 : index
    %c0_0 = arith.constant 0 : index
    %0 = vector.load %arg1[%c0, %c0_0] : memref<8x256xf32, #tpu.memory_space<vmem>>, vector<8x256xf32>
    %c0_1 = arith.constant 0 : index
    %c0_2 = arith.constant 0 : index
    %1 = vector.load %arg2[%c0_1, %c0_2] : memref<8x256xf32, #tpu.memory_space<vmem>>, vector<8x256xf32>
    %cst = arith.constant -0.995863974 : f32
    %2 = vector.broadcast %cst : f32 to vector<8x256xf32>
    %3 = arith.mulf %1, %2 : vector<8x256xf32>
    %4 = arith.addf %0, %3 : vector<8x256xf32>
    %c0_3 = arith.constant 0 : index
    %c0_4 = arith.constant 0 : index
    %5 = vector.load %arg3[%c0_3, %c0_4] : memref<8x256xf32, #tpu.memory_space<vmem>>, vector<8x256xf32>
    %cst_5 = arith.constant 0.620430886 : f32
    %6 = vector.broadcast %cst_5 : f32 to vector<8x256xf32>
    %7 = arith.mulf %5, %6 : vector<8x256xf32>
    %8 = arith.addf %4, %7 : vector<8x256xf32>
    %c0_6 = arith.constant 0 : index
    %c0_7 = arith.constant 0 : index
    %9 = vector.load %arg4[%c0_6, %c0_7] : memref<8x256xf32, #tpu.memory_space<vmem>>, vector<8x256xf32>
    %cst_8 = arith.constant 0.398433119 : f32
    %10 = vector.broadcast %cst_8 : f32 to vector<8x256xf32>
    %11 = arith.mulf %9, %10 : vector<8x256xf32>
    %12 = arith.addf %8, %11 : vector<8x256xf32>
    %c0_9 = arith.constant 0 : index
    %c0_10 = arith.constant 0 : index
    %13 = vector.load %arg5[%c0_9, %c0_10] : memref<8x256xf32, #tpu.memory_space<vmem>>, vector<8x256xf32>
    tpu.vector_store %arg5[%c0_9, %c0_10], %12 {strides = array<i32>} : memref<8x256xf32, #tpu.memory_space<vmem>>, vector<8x256xf32>,
    %cst_11 = arith.constant 1.52136469 : f32
    %14 = vector.broadcast %cst_11 : f32 to vector<8x256xf32>
    %15 = arith.mulf %12, %14 : vector<8x256xf32>
    %c0_12 = arith.constant 0 : index
    %c0_13 = arith.constant 0 : index
    %16 = vector.load %arg6[%c0_12, %c0_13] : memref<8x256xf32, #tpu.memory_space<vmem>>, vector<8x256xf32>
    tpu.vector_store %arg6[%c0_12, %c0_13], %15 {strides = array<i32>} : memref<8x256xf32, #tpu.memory_space<vmem>>, vector<8x256xf32>,
    return
  }
  func.func @transform_0(%arg0: i32) -> (i32, i32) {
    %c0_i32 = arith.constant 0 : i32
    %c0_i32_0 = arith.constant 0 : i32
    return %arg0, %c0_i32 : i32, i32
  }
  func.func @transform_1(%arg0: i32) -> (i32, i32) {
    %c0_i32 = arith.constant 0 : i32
    %c0_i32_0 = arith.constant 0 : i32
    return %arg0, %c0_i32 : i32, i32
  }
  func.func @transform_2(%arg0: i32) -> (i32, i32) {
    %c0_i32 = arith.constant 0 : i32
    %c0_i32_0 = arith.constant 0 : i32
    return %arg0, %c0_i32 : i32, i32
  }
  func.func @transform_3(%arg0: i32) -> (i32, i32) {
    %c0_i32 = arith.constant 0 : i32
    %c0_i32_0 = arith.constant 0 : i32
    return %arg0, %c0_i32 : i32, i32
  }
  func.func @transform_4(%arg0: i32) -> (i32, i32) {
    %c0_i32 = arith.constant 0 : i32
    %c0_i32_0 = arith.constant 0 : i32
    return %arg0, %c0_i32 : i32, i32
  }
  func.func @transform_5(%arg0: i32) -> (i32, i32) {
    %c0_i32 = arith.constant 0 : i32
    %c0_i32_0 = arith.constant 0 : i32
    return %arg0, %c0_i32 : i32, i32
  }
}

module attributes {stable_mosaic.version = 11 : i64} {
  func.func @kernel(%arg0: i32, %arg1: memref<8x256xf32, #tpu.memory_space<vmem>>, %arg2: memref<8x256xf32, #tpu.memory_space<vmem>>, %arg3: memref<8x256xf32, #tpu.memory_space<vmem>>, %arg4: memref<8x256xf32, #tpu.memory_space<vmem>>) attributes {dimension_semantics = [#tpu.dimension_semantics<parallel>], iteration_bounds = array<i64: 1>, scalar_prefetch = 0 : i64, scratch_operands = 0 : i64, tpu.core_type = #tpu.core_type<tc>, window_params = [{transform_indices = @transform_0, window_bounds = array<i64: 8, 256>}, {transform_indices = @transform_1, window_bounds = array<i64: 8, 256>}, {transform_indices = @transform_2, window_bounds = array<i64: 8, 256>}, {transform_indices = @transform_3, window_bounds = array<i64: 8, 256>}]} {
    %c0 = arith.constant 0 : index
    %c0_0 = arith.constant 0 : index
    %0 = vector.load %arg1[%c0, %c0_0] : memref<8x256xf32, #tpu.memory_space<vmem>>, vector<8x256xf32>
    %cst = arith.constant 0.809997439 : f32
    %1 = vector.broadcast %cst : f32 to vector<8x256xf32>
    %2 = arith.mulf %0, %1 : vector<8x256xf32>
    %c0_1 = arith.constant 0 : index
    %c0_2 = arith.constant 0 : index
    %3 = vector.load %arg2[%c0_1, %c0_2] : memref<8x256xf32, #tpu.memory_space<vmem>>, vector<8x256xf32>
    %cst_3 = arith.constant 1.463530e-01 : f32
    %4 = vector.broadcast %cst_3 : f32 to vector<8x256xf32>
    %5 = arith.mulf %3, %4 : vector<8x256xf32>
    %6 = arith.addf %2, %5 : vector<8x256xf32>
    %c0_4 = arith.constant 0 : index
    %c0_5 = arith.constant 0 : index
    %7 = vector.load %arg3[%c0_4, %c0_5] : memref<8x256xf32, #tpu.memory_space<vmem>>, vector<8x256xf32>
    tpu.vector_store %arg3[%c0_4, %c0_5], %6 {strides = array<i32>} : memref<8x256xf32, #tpu.memory_space<vmem>>, vector<8x256xf32>,
    %cst_6 = arith.constant 1.81105649 : f32
    %8 = vector.broadcast %cst_6 : f32 to vector<8x256xf32>
    %9 = arith.mulf %6, %8 : vector<8x256xf32>
    %c0_7 = arith.constant 0 : index
    %c0_8 = arith.constant 0 : index
    %10 = vector.load %arg4[%c0_7, %c0_8] : memref<8x256xf32, #tpu.memory_space<vmem>>, vector<8x256xf32>
    tpu.vector_store %arg4[%c0_7, %c0_8], %9 {strides = array<i32>} : memref<8x256xf32, #tpu.memory_space<vmem>>, vector<8x256xf32>,
    return
  }
  func.func @transform_0(%arg0: i32) -> (i32, i32) {
    %c0_i32 = arith.constant 0 : i32
    %c0_i32_0 = arith.constant 0 : i32
    return %arg0, %c0_i32 : i32, i32
  }
  func.func @transform_1(%arg0: i32) -> (i32, i32) {
    %c0_i32 = arith.constant 0 : i32
    %c0_i32_0 = arith.constant 0 : i32
    return %arg0, %c0_i32 : i32, i32
  }
  func.func @transform_2(%arg0: i32) -> (i32, i32) {
    %c0_i32 = arith.constant 0 : i32
    %c0_i32_0 = arith.constant 0 : i32
    return %arg0, %c0_i32 : i32, i32
  }
  func.func @transform_3(%arg0: i32) -> (i32, i32) {
    %c0_i32 = arith.constant 0 : i32
    %c0_i32_0 = arith.constant 0 : i32
    return %arg0, %c0_i32 : i32, i32
  }
}

module attributes {stable_mosaic.version = 11 : i64} {
  func.func @kernel(%arg0: i32, %arg1: memref<8x256xf32, #tpu.memory_space<vmem>>, %arg2: memref<8x256xf32, #tpu.memory_space<vmem>>, %arg3: memref<8x256xf32, #tpu.memory_space<vmem>>, %arg4: memref<8x256xf32, #tpu.memory_space<vmem>>, %arg5: memref<8x256xf32, #tpu.memory_space<vmem>>, %arg6: memref<8x256xf32, #tpu.memory_space<vmem>>) attributes {dimension_semantics = [#tpu.dimension_semantics<parallel>], iteration_bounds = array<i64: 1>, scalar_prefetch = 0 : i64, scratch_operands = 0 : i64, tpu.core_type = #tpu.core_type<tc>, window_params = [{transform_indices = @transform_0, window_bounds = array<i64: 8, 256>}, {transform_indices = @transform_1, window_bounds = array<i64: 8, 256>}, {transform_indices = @transform_2, window_bounds = array<i64: 8, 256>}, {transform_indices = @transform_3, window_bounds = array<i64: 8, 256>}, {transform_indices = @transform_4, window_bounds = array<i64: 8, 256>}, {transform_indices = @transform_5, window_bounds = array<i64: 8, 256>}]} {
    %c0 = arith.constant 0 : index
    %c0_0 = arith.constant 0 : index
    %0 = vector.load %arg1[%c0, %c0_0] : memref<8x256xf32, #tpu.memory_space<vmem>>, vector<8x256xf32>
    %c0_1 = arith.constant 0 : index
    %c0_2 = arith.constant 0 : index
    %1 = vector.load %arg2[%c0_1, %c0_2] : memref<8x256xf32, #tpu.memory_space<vmem>>, vector<8x256xf32>
    %cst = arith.constant -0.29567796 : f32
    %2 = vector.broadcast %cst : f32 to vector<8x256xf32>
    %3 = arith.mulf %1, %2 : vector<8x256xf32>
    %4 = arith.addf %0, %3 : vector<8x256xf32>
    %c0_3 = arith.constant 0 : index
    %c0_4 = arith.constant 0 : index
    %5 = vector.load %arg3[%c0_3, %c0_4] : memref<8x256xf32, #tpu.memory_space<vmem>>, vector<8x256xf32>
    %cst_5 = arith.constant 0.348441839 : f32
    %6 = vector.broadcast %cst_5 : f32 to vector<8x256xf32>
    %7 = arith.mulf %5, %6 : vector<8x256xf32>
    %8 = arith.addf %4, %7 : vector<8x256xf32>
    %c0_6 = arith.constant 0 : index
    %c0_7 = arith.constant 0 : index
    %9 = vector.load %arg4[%c0_6, %c0_7] : memref<8x256xf32, #tpu.memory_space<vmem>>, vector<8x256xf32>
    %cst_8 = arith.constant 0.126943097 : f32
    %10 = vector.broadcast %cst_8 : f32 to vector<8x256xf32>
    %11 = arith.mulf %9, %10 : vector<8x256xf32>
    %12 = arith.addf %8, %11 : vector<8x256xf32>
    %c0_9 = arith.constant 0 : index
    %c0_10 = arith.constant 0 : index
    %13 = vector.load %arg5[%c0_9, %c0_10] : memref<8x256xf32, #tpu.memory_space<vmem>>, vector<8x256xf32>
    tpu.vector_store %arg5[%c0_9, %c0_10], %12 {strides = array<i32>} : memref<8x256xf32, #tpu.memory_space<vmem>>, vector<8x256xf32>,
    %cst_11 = arith.constant 1.93214321 : f32
    %14 = vector.broadcast %cst_11 : f32 to vector<8x256xf32>
    %15 = arith.mulf %12, %14 : vector<8x256xf32>
    %c0_12 = arith.constant 0 : index
    %c0_13 = arith.constant 0 : index
    %16 = vector.load %arg6[%c0_12, %c0_13] : memref<8x256xf32, #tpu.memory_space<vmem>>, vector<8x256xf32>
    tpu.vector_store %arg6[%c0_12, %c0_13], %15 {strides = array<i32>} : memref<8x256xf32, #tpu.memory_space<vmem>>, vector<8x256xf32>,
    return
  }
  func.func @transform_0(%arg0: i32) -> (i32, i32) {
    %c0_i32 = arith.constant 0 : i32
    %c0_i32_0 = arith.constant 0 : i32
    return %arg0, %c0_i32 : i32, i32
  }
  func.func @transform_1(%arg0: i32) -> (i32, i32) {
    %c0_i32 = arith.constant 0 : i32
    %c0_i32_0 = arith.constant 0 : i32
    return %arg0, %c0_i32 : i32, i32
  }
  func.func @transform_2(%arg0: i32) -> (i32, i32) {
    %c0_i32 = arith.constant 0 : i32
    %c0_i32_0 = arith.constant 0 : i32
    return %arg0, %c0_i32 : i32, i32
  }
  func.func @transform_3(%arg0: i32) -> (i32, i32) {
    %c0_i32 = arith.constant 0 : i32
    %c0_i32_0 = arith.constant 0 : i32
    return %arg0, %c0_i32 : i32, i32
  }
  func.func @transform_4(%arg0: i32) -> (i32, i32) {
    %c0_i32 = arith.constant 0 : i32
    %c0_i32_0 = arith.constant 0 : i32
    return %arg0, %c0_i32 : i32, i32
  }
  func.func @transform_5(%arg0: i32) -> (i32, i32) {
    %c0_i32 = arith.constant 0 : i32
    %c0_i32_0 = arith.constant 0 : i32
    return %arg0, %c0_i32 : i32, i32
  }
}

module attributes {stable_mosaic.version = 11 : i64} {
  func.func @kernel(%arg0: i32, %arg1: memref<8x256xf32, #tpu.memory_space<vmem>>, %arg2: memref<8x256xf32, #tpu.memory_space<vmem>>, %arg3: memref<8x256xf32, #tpu.memory_space<vmem>>, %arg4: memref<8x256xf32, #tpu.memory_space<vmem>>) attributes {dimension_semantics = [#tpu.dimension_semantics<parallel>], iteration_bounds = array<i64: 1>, scalar_prefetch = 0 : i64, scratch_operands = 0 : i64, tpu.core_type = #tpu.core_type<tc>, window_params = [{transform_indices = @transform_0, window_bounds = array<i64: 8, 256>}, {transform_indices = @transform_1, window_bounds = array<i64: 8, 256>}, {transform_indices = @transform_2, window_bounds = array<i64: 8, 256>}, {transform_indices = @transform_3, window_bounds = array<i64: 8, 256>}]} {
    %c0 = arith.constant 0 : index
    %c0_0 = arith.constant 0 : index
    %0 = vector.load %arg1[%c0, %c0_0] : memref<8x256xf32, #tpu.memory_space<vmem>>, vector<8x256xf32>
    %cst = arith.constant 0.968967258 : f32
    %1 = vector.broadcast %cst : f32 to vector<8x256xf32>
    %2 = arith.mulf %0, %1 : vector<8x256xf32>
    %c0_1 = arith.constant 0 : index
    %c0_2 = arith.constant 0 : index
    %3 = vector.load %arg2[%c0_1, %c0_2] : memref<8x256xf32, #tpu.memory_space<vmem>>, vector<8x256xf32>
    %cst_3 = arith.constant 0.0600770973 : f32
    %4 = vector.broadcast %cst_3 : f32 to vector<8x256xf32>
    %5 = arith.mulf %3, %4 : vector<8x256xf32>
    %6 = arith.addf %2, %5 : vector<8x256xf32>
    %c0_4 = arith.constant 0 : index
    %c0_5 = arith.constant 0 : index
    %7 = vector.load %arg3[%c0_4, %c0_5] : memref<8x256xf32, #tpu.memory_space<vmem>>, vector<8x256xf32>
    tpu.vector_store %arg3[%c0_4, %c0_5], %6 {strides = array<i32>} : memref<8x256xf32, #tpu.memory_space<vmem>>, vector<8x256xf32>,
    %cst_6 = arith.constant 1.97986734 : f32
    %8 = vector.broadcast %cst_6 : f32 to vector<8x256xf32>
    %9 = arith.mulf %6, %8 : vector<8x256xf32>
    %c0_7 = arith.constant 0 : index
    %c0_8 = arith.constant 0 : index
    %10 = vector.load %arg4[%c0_7, %c0_8] : memref<8x256xf32, #tpu.memory_space<vmem>>, vector<8x256xf32>
    tpu.vector_store %arg4[%c0_7, %c0_8], %9 {strides = array<i32>} : memref<8x256xf32, #tpu.memory_space<vmem>>, vector<8x256xf32>,
    return
  }
  func.func @transform_0(%arg0: i32) -> (i32, i32) {
    %c0_i32 = arith.constant 0 : i32
    %c0_i32_0 = arith.constant 0 : i32
    return %arg0, %c0_i32 : i32, i32
  }
  func.func @transform_1(%arg0: i32) -> (i32, i32) {
    %c0_i32 = arith.constant 0 : i32
    %c0_i32_0 = arith.constant 0 : i32
    return %arg0, %c0_i32 : i32, i32
  }
  func.func @transform_2(%arg0: i32) -> (i32, i32) {
    %c0_i32 = arith.constant 0 : i32
    %c0_i32_0 = arith.constant 0 : i32
    return %arg0, %c0_i32 : i32, i32
  }
  func.func @transform_3(%arg0: i32) -> (i32, i32) {
    %c0_i32 = arith.constant 0 : i32
    %c0_i32_0 = arith.constant 0 : i32
    return %arg0, %c0_i32 : i32, i32
  }
}

module attributes {stable_mosaic.version = 11 : i64} {
  func.func @kernel(%arg0: i32, %arg1: memref<8x256xf32, #tpu.memory_space<vmem>>, %arg2: memref<8x256xf32, #tpu.memory_space<vmem>>, %arg3: memref<8x256xf32, #tpu.memory_space<vmem>>, %arg4: memref<8x256xf32, #tpu.memory_space<vmem>>, %arg5: memref<8x256xf32, #tpu.memory_space<vmem>>, %arg6: memref<8x256xf32, #tpu.memory_space<vmem>>) attributes {dimension_semantics = [#tpu.dimension_semantics<parallel>], iteration_bounds = array<i64: 1>, scalar_prefetch = 0 : i64, scratch_operands = 0 : i64, tpu.core_type = #tpu.core_type<tc>, window_params = [{transform_indices = @transform_0, window_bounds = array<i64: 8, 256>}, {transform_indices = @transform_1, window_bounds = array<i64: 8, 256>}, {transform_indices = @transform_2, window_bounds = array<i64: 8, 256>}, {transform_indices = @transform_3, window_bounds = array<i64: 8, 256>}, {transform_indices = @transform_4, window_bounds = array<i64: 8, 256>}, {transform_indices = @transform_5, window_bounds = array<i64: 8, 256>}]} {
    %c0 = arith.constant 0 : index
    %c0_0 = arith.constant 0 : index
    %0 = vector.load %arg1[%c0, %c0_0] : memref<8x256xf32, #tpu.memory_space<vmem>>, vector<8x256xf32>
    %c0_1 = arith.constant 0 : index
    %c0_2 = arith.constant 0 : index
    %1 = vector.load %arg2[%c0_1, %c0_2] : memref<8x256xf32, #tpu.memory_space<vmem>>, vector<8x256xf32>
    %cst = arith.constant -0.0348513797 : f32
    %2 = vector.broadcast %cst : f32 to vector<8x256xf32>
    %3 = arith.mulf %1, %2 : vector<8x256xf32>
    %4 = arith.addf %0, %3 : vector<8x256xf32>
    %c0_3 = arith.constant 0 : index
    %c0_4 = arith.constant 0 : index
    %5 = vector.load %arg3[%c0_3, %c0_4] : memref<8x256xf32, #tpu.memory_space<vmem>>, vector<8x256xf32>
    %cst_5 = arith.constant 0.123122022 : f32
    %6 = vector.broadcast %cst_5 : f32 to vector<8x256xf32>
    %7 = arith.mulf %5, %6 : vector<8x256xf32>
    %8 = arith.addf %4, %7 : vector<8x256xf32>
    %c0_6 = arith.constant 0 : index
    %c0_7 = arith.constant 0 : index
    %9 = vector.load %arg4[%c0_6, %c0_7] : memref<8x256xf32, #tpu.memory_space<vmem>>, vector<8x256xf32>
    %cst_8 = arith.constant 0.0340072811 : f32
    %10 = vector.broadcast %cst_8 : f32 to vector<8x256xf32>
    %11 = arith.mulf %9, %10 : vector<8x256xf32>
    %12 = arith.addf %8, %11 : vector<8x256xf32>
    %c0_9 = arith.constant 0 : index
    %c0_10 = arith.constant 0 : index
    %13 = vector.load %arg5[%c0_9, %c0_10] : memref<8x256xf32, #tpu.memory_space<vmem>>, vector<8x256xf32>
    tpu.vector_store %arg5[%c0_9, %c0_10], %12 {strides = array<i32>} : memref<8x256xf32, #tpu.memory_space<vmem>>, vector<8x256xf32>,
    %cst_11 = arith.constant 1.99504662 : f32
    %14 = vector.broadcast %cst_11 : f32 to vector<8x256xf32>
    %15 = arith.mulf %12, %14 : vector<8x256xf32>
    %c0_12 = arith.constant 0 : index
    %c0_13 = arith.constant 0 : index
    %16 = vector.load %arg6[%c0_12, %c0_13] : memref<8x256xf32, #tpu.memory_space<vmem>>, vector<8x256xf32>
    tpu.vector_store %arg6[%c0_12, %c0_13], %15 {strides = array<i32>} : memref<8x256xf32, #tpu.memory_space<vmem>>, vector<8x256xf32>,
    return
  }
  func.func @transform_0(%arg0: i32) -> (i32, i32) {
    %c0_i32 = arith.constant 0 : i32
    %c0_i32_0 = arith.constant 0 : i32
    return %arg0, %c0_i32 : i32, i32
  }
  func.func @transform_1(%arg0: i32) -> (i32, i32) {
    %c0_i32 = arith.constant 0 : i32
    %c0_i32_0 = arith.constant 0 : i32
    return %arg0, %c0_i32 : i32, i32
  }
  func.func @transform_2(%arg0: i32) -> (i32, i32) {
    %c0_i32 = arith.constant 0 : i32
    %c0_i32_0 = arith.constant 0 : i32
    return %arg0, %c0_i32 : i32, i32
  }
  func.func @transform_3(%arg0: i32) -> (i32, i32) {
    %c0_i32 = arith.constant 0 : i32
    %c0_i32_0 = arith.constant 0 : i32
    return %arg0, %c0_i32 : i32, i32
  }
  func.func @transform_4(%arg0: i32) -> (i32, i32) {
    %c0_i32 = arith.constant 0 : i32
    %c0_i32_0 = arith.constant 0 : i32
    return %arg0, %c0_i32 : i32, i32
  }
  func.func @transform_5(%arg0: i32) -> (i32, i32) {
    %c0_i32 = arith.constant 0 : i32
    %c0_i32_0 = arith.constant 0 : i32
    return %arg0, %c0_i32 : i32, i32
  }
}

module attributes {stable_mosaic.version = 11 : i64} {
  func.func @kernel(%arg0: i32, %arg1: memref<8x256xf32, #tpu.memory_space<vmem>>, %arg2: memref<8x256xf32, #tpu.memory_space<vmem>>, %arg3: memref<8x256xf32, #tpu.memory_space<vmem>>, %arg4: memref<8x256xf32, #tpu.memory_space<vmem>>) attributes {dimension_semantics = [#tpu.dimension_semantics<parallel>], iteration_bounds = array<i64: 1>, scalar_prefetch = 0 : i64, scratch_operands = 0 : i64, tpu.core_type = #tpu.core_type<tc>, window_params = [{transform_indices = @transform_0, window_bounds = array<i64: 8, 256>}, {transform_indices = @transform_1, window_bounds = array<i64: 8, 256>}, {transform_indices = @transform_2, window_bounds = array<i64: 8, 256>}, {transform_indices = @transform_3, window_bounds = array<i64: 8, 256>}]} {
    %c0 = arith.constant 0 : index
    %c0_0 = arith.constant 0 : index
    %0 = vector.load %arg1[%c0, %c0_0] : memref<8x256xf32, #tpu.memory_space<vmem>>, vector<8x256xf32>
    %cst = arith.constant 0.99763453 : f32
    %1 = vector.broadcast %cst : f32 to vector<8x256xf32>
    %2 = arith.mulf %0, %1 : vector<8x256xf32>
    %c0_1 = arith.constant 0 : index
    %c0_2 = arith.constant 0 : index
    %3 = vector.load %arg2[%c0_1, %c0_2] : memref<8x256xf32, #tpu.memory_space<vmem>>, vector<8x256xf32>
    %cst_3 = arith.constant 0.0168154407 : f32
    %4 = vector.broadcast %cst_3 : f32 to vector<8x256xf32>
    %5 = arith.mulf %3, %4 : vector<8x256xf32>
    %6 = arith.addf %2, %5 : vector<8x256xf32>
    %c0_4 = arith.constant 0 : index
    %c0_5 = arith.constant 0 : index
    %7 = vector.load %arg3[%c0_4, %c0_5] : memref<8x256xf32, #tpu.memory_space<vmem>>, vector<8x256xf32>
    tpu.vector_store %arg3[%c0_4, %c0_5], %6 {strides = array<i32>} : memref<8x256xf32, #tpu.memory_space<vmem>>, vector<8x256xf32>,
    %cst_6 = arith.constant 1.99864733 : f32
    %8 = vector.broadcast %cst_6 : f32 to vector<8x256xf32>
    %9 = arith.mulf %6, %8 : vector<8x256xf32>
    %c0_7 = arith.constant 0 : index
    %c0_8 = arith.constant 0 : index
    %10 = vector.load %arg4[%c0_7, %c0_8] : memref<8x256xf32, #tpu.memory_space<vmem>>, vector<8x256xf32>
    tpu.vector_store %arg4[%c0_7, %c0_8], %9 {strides = array<i32>} : memref<8x256xf32, #tpu.memory_space<vmem>>, vector<8x256xf32>,
    return
  }
  func.func @transform_0(%arg0: i32) -> (i32, i32) {
    %c0_i32 = arith.constant 0 : i32
    %c0_i32_0 = arith.constant 0 : i32
    return %arg0, %c0_i32 : i32, i32
  }
  func.func @transform_1(%arg0: i32) -> (i32, i32) {
    %c0_i32 = arith.constant 0 : i32
    %c0_i32_0 = arith.constant 0 : i32
    return %arg0, %c0_i32 : i32, i32
  }
  func.func @transform_2(%arg0: i32) -> (i32, i32) {
    %c0_i32 = arith.constant 0 : i32
    %c0_i32_0 = arith.constant 0 : i32
    return %arg0, %c0_i32 : i32, i32
  }
  func.func @transform_3(%arg0: i32) -> (i32, i32) {
    %c0_i32 = arith.constant 0 : i32
    %c0_i32_0 = arith.constant 0 : i32
    return %arg0, %c0_i32 : i32, i32
  }
}

module attributes {stable_mosaic.version = 11 : i64} {
  func.func @kernel(%arg0: i32, %arg1: memref<8x256xf32, #tpu.memory_space<vmem>>, %arg2: memref<8x256xf32, #tpu.memory_space<vmem>>, %arg3: memref<8x256xf32, #tpu.memory_space<vmem>>, %arg4: memref<8x256xf32, #tpu.memory_space<vmem>>, %arg5: memref<8x256xf32, #tpu.memory_space<vmem>>, %arg6: memref<8x256xf32, #tpu.memory_space<vmem>>) attributes {dimension_semantics = [#tpu.dimension_semantics<parallel>], iteration_bounds = array<i64: 1>, scalar_prefetch = 0 : i64, scratch_operands = 0 : i64, tpu.core_type = #tpu.core_type<tc>, window_params = [{transform_indices = @transform_0, window_bounds = array<i64: 8, 256>}, {transform_indices = @transform_1, window_bounds = array<i64: 8, 256>}, {transform_indices = @transform_2, window_bounds = array<i64: 8, 256>}, {transform_indices = @transform_3, window_bounds = array<i64: 8, 256>}, {transform_indices = @transform_4, window_bounds = array<i64: 8, 256>}, {transform_indices = @transform_5, window_bounds = array<i64: 8, 256>}]} {
    %c0 = arith.constant 0 : index
    %c0_0 = arith.constant 0 : index
    %0 = vector.load %arg1[%c0, %c0_0] : memref<8x256xf32, #tpu.memory_space<vmem>>, vector<8x256xf32>
    %c0_1 = arith.constant 0 : index
    %c0_2 = arith.constant 0 : index
    %1 = vector.load %arg2[%c0_1, %c0_2] : memref<8x256xf32, #tpu.memory_space<vmem>>, vector<8x256xf32>
    %cst = arith.constant -0.00247780979 : f32
    %2 = vector.broadcast %cst : f32 to vector<8x256xf32>
    %3 = arith.mulf %1, %2 : vector<8x256xf32>
    %4 = arith.addf %0, %3 : vector<8x256xf32>
    %c0_3 = arith.constant 0 : index
    %c0_4 = arith.constant 0 : index
    %5 = vector.load %arg3[%c0_3, %c0_4] : memref<8x256xf32, #tpu.memory_space<vmem>>, vector<8x256xf32>
    %cst_5 = arith.constant 0.0336915813 : f32
    %6 = vector.broadcast %cst_5 : f32 to vector<8x256xf32>
    %7 = arith.mulf %5, %6 : vector<8x256xf32>
    %8 = arith.addf %4, %7 : vector<8x256xf32>
    %c0_6 = arith.constant 0 : index
    %c0_7 = arith.constant 0 : index
    %9 = vector.load %arg4[%c0_6, %c0_7] : memref<8x256xf32, #tpu.memory_space<vmem>>, vector<8x256xf32>
    %cst_8 = arith.constant 0.00720843067 : f32
    %10 = vector.broadcast %cst_8 : f32 to vector<8x256xf32>
    %11 = arith.mulf %9, %10 : vector<8x256xf32>
    %12 = arith.addf %8, %11 : vector<8x256xf32>
    %c0_9 = arith.constant 0 : index
    %c0_10 = arith.constant 0 : index
    %13 = vector.load %arg5[%c0_9, %c0_10] : memref<8x256xf32, #tpu.memory_space<vmem>>, vector<8x256xf32>
    tpu.vector_store %arg5[%c0_9, %c0_10], %12 {strides = array<i32>} : memref<8x256xf32, #tpu.memory_space<vmem>>, vector<8x256xf32>,
    %cst_11 = arith.constant 1.99978268 : f32
    %14 = vector.broadcast %cst_11 : f32 to vector<8x256xf32>
    %15 = arith.mulf %12, %14 : vector<8x256xf32>
    %c0_12 = arith.constant 0 : index
    %c0_13 = arith.constant 0 : index
    %16 = vector.load %arg6[%c0_12, %c0_13] : memref<8x256xf32, #tpu.memory_space<vmem>>, vector<8x256xf32>
    tpu.vector_store %arg6[%c0_12, %c0_13], %15 {strides = array<i32>} : memref<8x256xf32, #tpu.memory_space<vmem>>, vector<8x256xf32>,
    return
  }
  func.func @transform_0(%arg0: i32) -> (i32, i32) {
    %c0_i32 = arith.constant 0 : i32
    %c0_i32_0 = arith.constant 0 : i32
    return %arg0, %c0_i32 : i32, i32
  }
  func.func @transform_1(%arg0: i32) -> (i32, i32) {
    %c0_i32 = arith.constant 0 : i32
    %c0_i32_0 = arith.constant 0 : i32
    return %arg0, %c0_i32 : i32, i32
  }
  func.func @transform_2(%arg0: i32) -> (i32, i32) {
    %c0_i32 = arith.constant 0 : i32
    %c0_i32_0 = arith.constant 0 : i32
    return %arg0, %c0_i32 : i32, i32
  }
  func.func @transform_3(%arg0: i32) -> (i32, i32) {
    %c0_i32 = arith.constant 0 : i32
    %c0_i32_0 = arith.constant 0 : i32
    return %arg0, %c0_i32 : i32, i32
  }
  func.func @transform_4(%arg0: i32) -> (i32, i32) {
    %c0_i32 = arith.constant 0 : i32
    %c0_i32_0 = arith.constant 0 : i32
    return %arg0, %c0_i32 : i32, i32
  }
  func.func @transform_5(%arg0: i32) -> (i32, i32) {
    %c0_i32 = arith.constant 0 : i32
    %c0_i32_0 = arith.constant 0 : i32
    return %arg0, %c0_i32 : i32, i32
  }
}

module attributes {stable_mosaic.version = 11 : i64} {
  func.func @kernel(%arg0: i32, %arg1: memref<8x256xf32, #tpu.memory_space<vmem>>, %arg2: memref<8x256xf32, #tpu.memory_space<vmem>>, %arg3: memref<8x256xf32, #tpu.memory_space<vmem>>, %arg4: memref<8x256xf32, #tpu.memory_space<vmem>>) attributes {dimension_semantics = [#tpu.dimension_semantics<parallel>], iteration_bounds = array<i64: 1>, scalar_prefetch = 0 : i64, scratch_operands = 0 : i64, tpu.core_type = #tpu.core_type<tc>, window_params = [{transform_indices = @transform_0, window_bounds = array<i64: 8, 256>}, {transform_indices = @transform_1, window_bounds = array<i64: 8, 256>}, {transform_indices = @transform_2, window_bounds = array<i64: 8, 256>}, {transform_indices = @transform_3, window_bounds = array<i64: 8, 256>}]} {
    %c0 = arith.constant 0 : index
    %c0_0 = arith.constant 0 : index
    %0 = vector.load %arg1[%c0, %c0_0] : memref<8x256xf32, #tpu.memory_space<vmem>>, vector<8x256xf32>
    %cst = arith.constant 0.999893784 : f32
    %1 = vector.broadcast %cst : f32 to vector<8x256xf32>
    %2 = arith.mulf %0, %1 : vector<8x256xf32>
    %c0_1 = arith.constant 0 : index
    %c0_2 = arith.constant 0 : index
    %3 = vector.load %arg2[%c0_1, %c0_2] : memref<8x256xf32, #tpu.memory_space<vmem>>, vector<8x256xf32>
    %cst_3 = arith.constant 0.00360211683 : f32
    %4 = vector.broadcast %cst_3 : f32 to vector<8x256xf32>
    %5 = arith.mulf %3, %4 : vector<8x256xf32>
    %6 = arith.addf %2, %5 : vector<8x256xf32>
    %c0_4 = arith.constant 0 : index
    %c0_5 = arith.constant 0 : index
    %7 = vector.load %arg3[%c0_4, %c0_5] : memref<8x256xf32, #tpu.memory_space<vmem>>, vector<8x256xf32>
    tpu.vector_store %arg3[%c0_4, %c0_5], %6 {strides = array<i32>} : memref<8x256xf32, #tpu.memory_space<vmem>>, vector<8x256xf32>,
    %cst_6 = arith.constant 1.99994314 : f32
    %8 = vector.broadcast %cst_6 : f32 to vector<8x256xf32>
    %9 = arith.mulf %6, %8 : vector<8x256xf32>
    %c0_7 = arith.constant 0 : index
    %c0_8 = arith.constant 0 : index
    %10 = vector.load %arg4[%c0_7, %c0_8] : memref<8x256xf32, #tpu.memory_space<vmem>>, vector<8x256xf32>
    tpu.vector_store %arg4[%c0_7, %c0_8], %9 {strides = array<i32>} : memref<8x256xf32, #tpu.memory_space<vmem>>, vector<8x256xf32>,
    return
  }
  func.func @transform_0(%arg0: i32) -> (i32, i32) {
    %c0_i32 = arith.constant 0 : i32
    %c0_i32_0 = arith.constant 0 : i32
    return %arg0, %c0_i32 : i32, i32
  }
  func.func @transform_1(%arg0: i32) -> (i32, i32) {
    %c0_i32 = arith.constant 0 : i32
    %c0_i32_0 = arith.constant 0 : i32
    return %arg0, %c0_i32 : i32, i32
  }
  func.func @transform_2(%arg0: i32) -> (i32, i32) {
    %c0_i32 = arith.constant 0 : i32
    %c0_i32_0 = arith.constant 0 : i32
    return %arg0, %c0_i32 : i32, i32
  }
  func.func @transform_3(%arg0: i32) -> (i32, i32) {
    %c0_i32 = arith.constant 0 : i32
    %c0_i32_0 = arith.constant 0 : i32
    return %arg0, %c0_i32 : i32, i32
  }
}

module attributes {stable_mosaic.version = 11 : i64} {
  func.func @kernel(%arg0: i32, %arg1: memref<8x256xf32, #tpu.memory_space<vmem>>, %arg2: memref<8x256xf32, #tpu.memory_space<vmem>>, %arg3: memref<8x256xf32, #tpu.memory_space<vmem>>, %arg4: memref<8x256xf32, #tpu.memory_space<vmem>>, %arg5: memref<8x256xf32, #tpu.memory_space<vmem>>, %arg6: memref<8x256xf32, #tpu.memory_space<vmem>>) attributes {dimension_semantics = [#tpu.dimension_semantics<parallel>], iteration_bounds = array<i64: 1>, scalar_prefetch = 0 : i64, scratch_operands = 0 : i64, tpu.core_type = #tpu.core_type<tc>, window_params = [{transform_indices = @transform_0, window_bounds = array<i64: 8, 256>}, {transform_indices = @transform_1, window_bounds = array<i64: 8, 256>}, {transform_indices = @transform_2, window_bounds = array<i64: 8, 256>}, {transform_indices = @transform_3, window_bounds = array<i64: 8, 256>}, {transform_indices = @transform_4, window_bounds = array<i64: 8, 256>}, {transform_indices = @transform_5, window_bounds = array<i64: 8, 256>}]} {
    %c0 = arith.constant 0 : index
    %c0_0 = arith.constant 0 : index
    %0 = vector.load %arg1[%c0, %c0_0] : memref<8x256xf32, #tpu.memory_space<vmem>>, vector<8x256xf32>
    %c0_1 = arith.constant 0 : index
    %c0_2 = arith.constant 0 : index
    %1 = vector.load %arg2[%c0_1, %c0_2] : memref<8x256xf32, #tpu.memory_space<vmem>>, vector<8x256xf32>
    %cst = arith.constant -1.08612185E-4 : f32
    %2 = vector.broadcast %cst : f32 to vector<8x256xf32>
    %3 = arith.mulf %1, %2 : vector<8x256xf32>
    %4 = arith.addf %0, %3 : vector<8x256xf32>
    %c0_3 = arith.constant 0 : index
    %c0_4 = arith.constant 0 : index
    %5 = vector.load %arg3[%c0_3, %c0_4] : memref<8x256xf32, #tpu.memory_space<vmem>>, vector<8x256xf32>
    %cst_5 = arith.constant 0.00720481202 : f32
    %6 = vector.broadcast %cst_5 : f32 to vector<8x256xf32>
    %7 = arith.mulf %5, %6 : vector<8x256xf32>
    %8 = arith.addf %4, %7 : vector<8x256xf32>
    %c0_6 = arith.constant 0 : index
    %c0_7 = arith.constant 0 : index
    %9 = vector.load %arg4[%c0_6, %c0_7] : memref<8x256xf32, #tpu.memory_space<vmem>>, vector<8x256xf32>
    %cst_8 = arith.constant 0.00109474082 : f32
    %10 = vector.broadcast %cst_8 : f32 to vector<8x256xf32>
    %11 = arith.mulf %9, %10 : vector<8x256xf32>
    %12 = arith.addf %8, %11 : vector<8x256xf32>
    %c0_9 = arith.constant 0 : index
    %c0_10 = arith.constant 0 : index
    %13 = vector.load %arg5[%c0_9, %c0_10] : memref<8x256xf32, #tpu.memory_space<vmem>>, vector<8x256xf32>
    tpu.vector_store %arg5[%c0_9, %c0_10], %12 {strides = array<i32>} : memref<8x256xf32, #tpu.memory_space<vmem>>, vector<8x256xf32>,
    %cst_11 = arith.constant 1.99999511 : f32
    %14 = vector.broadcast %cst_11 : f32 to vector<8x256xf32>
    %15 = arith.mulf %12, %14 : vector<8x256xf32>
    %c0_12 = arith.constant 0 : index
    %c0_13 = arith.constant 0 : index
    %16 = vector.load %arg6[%c0_12, %c0_13] : memref<8x256xf32, #tpu.memory_space<vmem>>, vector<8x256xf32>
    tpu.vector_store %arg6[%c0_12, %c0_13], %15 {strides = array<i32>} : memref<8x256xf32, #tpu.memory_space<vmem>>, vector<8x256xf32>,
    return
  }
  func.func @transform_0(%arg0: i32) -> (i32, i32) {
    %c0_i32 = arith.constant 0 : i32
    %c0_i32_0 = arith.constant 0 : i32
    return %arg0, %c0_i32 : i32, i32
  }
  func.func @transform_1(%arg0: i32) -> (i32, i32) {
    %c0_i32 = arith.constant 0 : i32
    %c0_i32_0 = arith.constant 0 : i32
    return %arg0, %c0_i32 : i32, i32
  }
  func.func @transform_2(%arg0: i32) -> (i32, i32) {
    %c0_i32 = arith.constant 0 : i32
    %c0_i32_0 = arith.constant 0 : i32
    return %arg0, %c0_i32 : i32, i32
  }
  func.func @transform_3(%arg0: i32) -> (i32, i32) {
    %c0_i32 = arith.constant 0 : i32
    %c0_i32_0 = arith.constant 0 : i32
    return %arg0, %c0_i32 : i32, i32
  }
  func.func @transform_4(%arg0: i32) -> (i32, i32) {
    %c0_i32 = arith.constant 0 : i32
    %c0_i32_0 = arith.constant 0 : i32
    return %arg0, %c0_i32 : i32, i32
  }
  func.func @transform_5(%arg0: i32) -> (i32, i32) {
    %c0_i32 = arith.constant 0 : i32
    %c0_i32_0 = arith.constant 0 : i32
    return %arg0, %c0_i32 : i32, i32
  }
}

module attributes {stable_mosaic.version = 11 : i64} {
  func.func @kernel(%arg0: i32, %arg1: memref<8x256xf32, #tpu.memory_space<vmem>>, %arg2: memref<8x256xf32, #tpu.memory_space<vmem>>, %arg3: memref<8x256xf32, #tpu.memory_space<vmem>>, %arg4: memref<8x256xf32, #tpu.memory_space<vmem>>) attributes {dimension_semantics = [#tpu.dimension_semantics<parallel>], iteration_bounds = array<i64: 1>, scalar_prefetch = 0 : i64, scratch_operands = 0 : i64, tpu.core_type = #tpu.core_type<tc>, window_params = [{transform_indices = @transform_0, window_bounds = array<i64: 8, 256>}, {transform_indices = @transform_1, window_bounds = array<i64: 8, 256>}, {transform_indices = @transform_2, window_bounds = array<i64: 8, 256>}, {transform_indices = @transform_3, window_bounds = array<i64: 8, 256>}]} {
    %c0 = arith.constant 0 : index
    %c0_0 = arith.constant 0 : index
    %0 = vector.load %arg1[%c0, %c0_0] : memref<8x256xf32, #tpu.memory_space<vmem>>, vector<8x256xf32>
    %cst = arith.constant 0.999997556 : f32
    %1 = vector.broadcast %cst : f32 to vector<8x256xf32>
    %2 = arith.mulf %0, %1 : vector<8x256xf32>
    %c0_1 = arith.constant 0 : index
    %c0_2 = arith.constant 0 : index
    %3 = vector.load %arg2[%c0_1, %c0_2] : memref<8x256xf32, #tpu.memory_space<vmem>>, vector<8x256xf32>
    %cst_3 = arith.constant 5.49135904E-4 : f32
    %4 = vector.broadcast %cst_3 : f32 to vector<8x256xf32>
    %5 = arith.mulf %3, %4 : vector<8x256xf32>
    %6 = arith.addf %2, %5 : vector<8x256xf32>
    %c0_4 = arith.constant 0 : index
    %c0_5 = arith.constant 0 : index
    %7 = vector.load %arg3[%c0_4, %c0_5] : memref<8x256xf32, #tpu.memory_space<vmem>>, vector<8x256xf32>
    tpu.vector_store %arg3[%c0_4, %c0_5], %6 {strides = array<i32>} : memref<8x256xf32, #tpu.memory_space<vmem>>, vector<8x256xf32>,
    %cst_6 = arith.constant 1.99999881 : f32
    %8 = vector.broadcast %cst_6 : f32 to vector<8x256xf32>
    %9 = arith.mulf %6, %8 : vector<8x256xf32>
    %c0_7 = arith.constant 0 : index
    %c0_8 = arith.constant 0 : index
    %10 = vector.load %arg4[%c0_7, %c0_8] : memref<8x256xf32, #tpu.memory_space<vmem>>, vector<8x256xf32>
    tpu.vector_store %arg4[%c0_7, %c0_8], %9 {strides = array<i32>} : memref<8x256xf32, #tpu.memory_space<vmem>>, vector<8x256xf32>,
    return
  }
  func.func @transform_0(%arg0: i32) -> (i32, i32) {
    %c0_i32 = arith.constant 0 : i32
    %c0_i32_0 = arith.constant 0 : i32
    return %arg0, %c0_i32 : i32, i32
  }
  func.func @transform_1(%arg0: i32) -> (i32, i32) {
    %c0_i32 = arith.constant 0 : i32
    %c0_i32_0 = arith.constant 0 : i32
    return %arg0, %c0_i32 : i32, i32
  }
  func.func @transform_2(%arg0: i32) -> (i32, i32) {
    %c0_i32 = arith.constant 0 : i32
    %c0_i32_0 = arith.constant 0 : i32
    return %arg0, %c0_i32 : i32, i32
  }
  func.func @transform_3(%arg0: i32) -> (i32, i32) {
    %c0_i32 = arith.constant 0 : i32
    %c0_i32_0 = arith.constant 0 : i32
    return %arg0, %c0_i32 : i32, i32
  }
}

module attributes {stable_mosaic.version = 11 : i64} {
  func.func @kernel(%arg0: i32, %arg1: memref<8x256xf32, #tpu.memory_space<vmem>>, %arg2: memref<8x256xf32, #tpu.memory_space<vmem>>, %arg3: memref<8x256xf32, #tpu.memory_space<vmem>>, %arg4: memref<8x256xf32, #tpu.memory_space<vmem>>, %arg5: memref<8x256xf32, #tpu.memory_space<vmem>>, %arg6: memref<8x256xf32, #tpu.memory_space<vmem>>) attributes {dimension_semantics = [#tpu.dimension_semantics<parallel>], iteration_bounds = array<i64: 1>, scalar_prefetch = 0 : i64, scratch_operands = 0 : i64, tpu.core_type = #tpu.core_type<tc>, window_params = [{transform_indices = @transform_0, window_bounds = array<i64: 8, 256>}, {transform_indices = @transform_1, window_bounds = array<i64: 8, 256>}, {transform_indices = @transform_2, window_bounds = array<i64: 8, 256>}, {transform_indices = @transform_3, window_bounds = array<i64: 8, 256>}, {transform_indices = @transform_4, window_bounds = array<i64: 8, 256>}, {transform_indices = @transform_5, window_bounds = array<i64: 8, 256>}]} {
    %c0 = arith.constant 0 : index
    %c0_0 = arith.constant 0 : index
    %0 = vector.load %arg1[%c0, %c0_0] : memref<8x256xf32, #tpu.memory_space<vmem>>, vector<8x256xf32>
    %c0_1 = arith.constant 0 : index
    %c0_2 = arith.constant 0 : index
    %1 = vector.load %arg2[%c0_1, %c0_2] : memref<8x256xf32, #tpu.memory_space<vmem>>, vector<8x256xf32>
    %cst = arith.constant -2.45208435E-6 : f32
    %2 = vector.broadcast %cst : f32 to vector<8x256xf32>
    %3 = arith.mulf %1, %2 : vector<8x256xf32>
    %4 = arith.addf %0, %3 : vector<8x256xf32>
    %c0_3 = arith.constant 0 : index
    %c0_4 = arith.constant 0 : index
    %5 = vector.load %arg3[%c0_3, %c0_4] : memref<8x256xf32, #tpu.memory_space<vmem>>, vector<8x256xf32>
    %cst_5 = arith.constant 0.00109827379 : f32
    %6 = vector.broadcast %cst_5 : f32 to vector<8x256xf32>
    %7 = arith.mulf %5, %6 : vector<8x256xf32>
    %8 = arith.addf %4, %7 : vector<8x256xf32>
    %c0_6 = arith.constant 0 : index
    %c0_7 = arith.constant 0 : index
    %9 = vector.load %arg4[%c0_6, %c0_7] : memref<8x256xf32, #tpu.memory_space<vmem>>, vector<8x256xf32>
    %cst_8 = arith.constant 9.95913796E-5 : f32
    %10 = vector.broadcast %cst_8 : f32 to vector<8x256xf32>
    %11 = arith.mulf %9, %10 : vector<8x256xf32>
    %12 = arith.addf %8, %11 : vector<8x256xf32>
    %c0_9 = arith.constant 0 : index
    %c0_10 = arith.constant 0 : index
    %13 = vector.load %arg5[%c0_9, %c0_10] : memref<8x256xf32, #tpu.memory_space<vmem>>, vector<8x256xf32>
    tpu.vector_store %arg5[%c0_9, %c0_10], %12 {strides = array<i32>} : memref<8x256xf32, #tpu.memory_space<vmem>>, vector<8x256xf32>,
    %cst_11 = arith.constant 2.000000e+00 : f32
    %14 = vector.broadcast %cst_11 : f32 to vector<8x256xf32>
    %15 = arith.mulf %12, %14 : vector<8x256xf32>
    %c0_12 = arith.constant 0 : index
    %c0_13 = arith.constant 0 : index
    %16 = vector.load %arg6[%c0_12, %c0_13] : memref<8x256xf32, #tpu.memory_space<vmem>>, vector<8x256xf32>
    tpu.vector_store %arg6[%c0_12, %c0_13], %15 {strides = array<i32>} : memref<8x256xf32, #tpu.memory_space<vmem>>, vector<8x256xf32>,
    return
  }
  func.func @transform_0(%arg0: i32) -> (i32, i32) {
    %c0_i32 = arith.constant 0 : i32
    %c0_i32_0 = arith.constant 0 : i32
    return %arg0, %c0_i32 : i32, i32
  }
  func.func @transform_1(%arg0: i32) -> (i32, i32) {
    %c0_i32 = arith.constant 0 : i32
    %c0_i32_0 = arith.constant 0 : i32
    return %arg0, %c0_i32 : i32, i32
  }
  func.func @transform_2(%arg0: i32) -> (i32, i32) {
    %c0_i32 = arith.constant 0 : i32
    %c0_i32_0 = arith.constant 0 : i32
    return %arg0, %c0_i32 : i32, i32
  }
  func.func @transform_3(%arg0: i32) -> (i32, i32) {
    %c0_i32 = arith.constant 0 : i32
    %c0_i32_0 = arith.constant 0 : i32
    return %arg0, %c0_i32 : i32, i32
  }
  func.func @transform_4(%arg0: i32) -> (i32, i32) {
    %c0_i32 = arith.constant 0 : i32
    %c0_i32_0 = arith.constant 0 : i32
    return %arg0, %c0_i32 : i32, i32
  }
  func.func @transform_5(%arg0: i32) -> (i32, i32) {
    %c0_i32 = arith.constant 0 : i32
    %c0_i32_0 = arith.constant 0 : i32
    return %arg0, %c0_i32 : i32, i32
  }
}

module attributes {stable_mosaic.version = 11 : i64} {
  func.func @kernel(%arg0: i32, %arg1: memref<8x256xf32, #tpu.memory_space<vmem>>, %arg2: memref<8x256xf32, #tpu.memory_space<vmem>>, %arg3: memref<8x256xf32, #tpu.memory_space<vmem>>, %arg4: memref<8x256xf32, #tpu.memory_space<vmem>>) attributes {dimension_semantics = [#tpu.dimension_semantics<parallel>], iteration_bounds = array<i64: 1>, scalar_prefetch = 0 : i64, scratch_operands = 0 : i64, tpu.core_type = #tpu.core_type<tc>, window_params = [{transform_indices = @transform_0, window_bounds = array<i64: 8, 256>}, {transform_indices = @transform_1, window_bounds = array<i64: 8, 256>}, {transform_indices = @transform_2, window_bounds = array<i64: 8, 256>}, {transform_indices = @transform_3, window_bounds = array<i64: 8, 256>}]} {
    %c0 = arith.constant 0 : index
    %c0_0 = arith.constant 0 : index
    %0 = vector.load %arg1[%c0, %c0_0] : memref<8x256xf32, #tpu.memory_space<vmem>>, vector<8x256xf32>
    %cst = arith.constant 1.000000e+00 : f32
    %1 = vector.broadcast %cst : f32 to vector<8x256xf32>
    %2 = arith.mulf %0, %1 : vector<8x256xf32>
    %c0_1 = arith.constant 0 : index
    %c0_2 = arith.constant 0 : index
    %3 = vector.load %arg2[%c0_1, %c0_2] : memref<8x256xf32, #tpu.memory_space<vmem>>, vector<8x256xf32>
    %cst_3 = arith.constant 5.000000e-05 : f32
    %4 = vector.broadcast %cst_3 : f32 to vector<8x256xf32>
    %5 = arith.mulf %3, %4 : vector<8x256xf32>
    %6 = arith.addf %2, %5 : vector<8x256xf32>
    %c0_4 = arith.constant 0 : index
    %c0_5 = arith.constant 0 : index
    %7 = vector.load %arg3[%c0_4, %c0_5] : memref<8x256xf32, #tpu.memory_space<vmem>>, vector<8x256xf32>
    tpu.vector_store %arg3[%c0_4, %c0_5], %6 {strides = array<i32>} : memref<8x256xf32, #tpu.memory_space<vmem>>, vector<8x256xf32>,
    %cst_6 = arith.constant 2.000000e+00 : f32
    %8 = vector.broadcast %cst_6 : f32 to vector<8x256xf32>
    %9 = arith.mulf %6, %8 : vector<8x256xf32>
    %c0_7 = arith.constant 0 : index
    %c0_8 = arith.constant 0 : index
    %10 = vector.load %arg4[%c0_7, %c0_8] : memref<8x256xf32, #tpu.memory_space<vmem>>, vector<8x256xf32>
    tpu.vector_store %arg4[%c0_7, %c0_8], %9 {strides = array<i32>} : memref<8x256xf32, #tpu.memory_space<vmem>>, vector<8x256xf32>,
    return
  }
  func.func @transform_0(%arg0: i32) -> (i32, i32) {
    %c0_i32 = arith.constant 0 : i32
    %c0_i32_0 = arith.constant 0 : i32
    return %arg0, %c0_i32 : i32, i32
  }
  func.func @transform_1(%arg0: i32) -> (i32, i32) {
    %c0_i32 = arith.constant 0 : i32
    %c0_i32_0 = arith.constant 0 : i32
    return %arg0, %c0_i32 : i32, i32
  }
  func.func @transform_2(%arg0: i32) -> (i32, i32) {
    %c0_i32 = arith.constant 0 : i32
    %c0_i32_0 = arith.constant 0 : i32
    return %arg0, %c0_i32 : i32, i32
  }
  func.func @transform_3(%arg0: i32) -> (i32, i32) {
    %c0_i32 = arith.constant 0 : i32
    %c0_i32_0 = arith.constant 0 : i32
    return %arg0, %c0_i32 : i32, i32
  }
}

module attributes {stable_mosaic.version = 11 : i64} {
  func.func @kernel(%arg0: i32, %arg1: memref<8x256xf32, #tpu.memory_space<vmem>>, %arg2: memref<8x256xf32, #tpu.memory_space<vmem>>, %arg3: memref<8x256xf32, #tpu.memory_space<vmem>>, %arg4: memref<8x256xf32, #tpu.memory_space<vmem>>, %arg5: memref<8x256xf32, #tpu.memory_space<vmem>>) attributes {dimension_semantics = [#tpu.dimension_semantics<parallel>], iteration_bounds = array<i64: 1>, scalar_prefetch = 0 : i64, scratch_operands = 0 : i64, tpu.core_type = #tpu.core_type<tc>, window_params = [{transform_indices = @transform_0, window_bounds = array<i64: 8, 256>}, {transform_indices = @transform_1, window_bounds = array<i64: 8, 256>}, {transform_indices = @transform_2, window_bounds = array<i64: 8, 256>}, {transform_indices = @transform_3, window_bounds = array<i64: 8, 256>}, {transform_indices = @transform_4, window_bounds = array<i64: 8, 256>}]} {
    %c0 = arith.constant 0 : index
    %c0_0 = arith.constant 0 : index
    %0 = vector.load %arg1[%c0, %c0_0] : memref<8x256xf32, #tpu.memory_space<vmem>>, vector<8x256xf32>
    %c0_1 = arith.constant 0 : index
    %c0_2 = arith.constant 0 : index
    %1 = vector.load %arg2[%c0_1, %c0_2] : memref<8x256xf32, #tpu.memory_space<vmem>>, vector<8x256xf32>
    %cst = arith.constant -2.000000e-08 : f32
    %2 = vector.broadcast %cst : f32 to vector<8x256xf32>
    %3 = arith.mulf %1, %2 : vector<8x256xf32>
    %4 = arith.addf %0, %3 : vector<8x256xf32>
    %c0_3 = arith.constant 0 : index
    %c0_4 = arith.constant 0 : index
    %5 = vector.load %arg3[%c0_3, %c0_4] : memref<8x256xf32, #tpu.memory_space<vmem>>, vector<8x256xf32>
    %cst_5 = arith.constant 9.99999974E-5 : f32
    %6 = vector.broadcast %cst_5 : f32 to vector<8x256xf32>
    %7 = arith.mulf %5, %6 : vector<8x256xf32>
    %8 = arith.addf %4, %7 : vector<8x256xf32>
    %c0_6 = arith.constant 0 : index
    %c0_7 = arith.constant 0 : index
    %9 = vector.load %arg4[%c0_6, %c0_7] : memref<8x256xf32, #tpu.memory_space<vmem>>, vector<8x256xf32>
    %cst_8 = arith.constant 0.000000e+00 : f32
    %10 = vector.broadcast %cst_8 : f32 to vector<8x256xf32>
    %11 = arith.mulf %9, %10 : vector<8x256xf32>
    %12 = arith.addf %8, %11 : vector<8x256xf32>
    %c0_9 = arith.constant 0 : index
    %c0_10 = arith.constant 0 : index
    %13 = vector.load %arg5[%c0_9, %c0_10] : memref<8x256xf32, #tpu.memory_space<vmem>>, vector<8x256xf32>
    tpu.vector_store %arg5[%c0_9, %c0_10], %12 {strides = array<i32>} : memref<8x256xf32, #tpu.memory_space<vmem>>, vector<8x256xf32>,
    return
  }
  func.func @transform_0(%arg0: i32) -> (i32, i32) {
    %c0_i32 = arith.constant 0 : i32
    %c0_i32_0 = arith.constant 0 : i32
    return %arg0, %c0_i32 : i32, i32
  }
  func.func @transform_1(%arg0: i32) -> (i32, i32) {
    %c0_i32 = arith.constant 0 : i32
    %c0_i32_0 = arith.constant 0 : i32
    return %arg0, %c0_i32 : i32, i32
  }
  func.func @transform_2(%arg0: i32) -> (i32, i32) {
    %c0_i32 = arith.constant 0 : i32
    %c0_i32_0 = arith.constant 0 : i32
    return %arg0, %c0_i32 : i32, i32
  }
  func.func @transform_3(%arg0: i32) -> (i32, i32) {
    %c0_i32 = arith.constant 0 : i32
    %c0_i32_0 = arith.constant 0 : i32
    return %arg0, %c0_i32 : i32, i32
  }
  func.func @transform_4(%arg0: i32) -> (i32, i32) {
    %c0_i32 = arith.constant 0 : i32
    %c0_i32_0 = arith.constant 0 : i32
    return %arg0, %c0_i32 : i32, i32
  }
}

</mosaic_0001>

<llo_original>
// kernel: squeeze.15
$region0: #{squeeze.15}
  %s0 = inlined_call_operand.vmem [shape: f32[1,2,8,128], index: 0, kind: input, shape index: {}]
  %s1 = inlined_call_operand.vmem [shape: f32[8,256], index: 1, kind: output, shape index: {}]
  %v2 = vld [vmem:[%s0] sm:$0xff]
  %3 = vst [vmem:[%s1] ss:$8 sm:$0x3] %v2
  %s4 = scalar_lea.vmem %s1, 4294967281
  %5 = vst [vmem:[%s4] ss:$8 sm:$0xc] %v2
  %s6 = scalar_lea.vmem %s1, 4294967266
  %7 = vst [vmem:[%s6] ss:$8 sm:$0x30] %v2
  %s8 = scalar_lea.vmem %s1, 4294967251
  %9 = vst [vmem:[%s8] ss:$8 sm:$0xc0] %v2
  %s10 = scalar_lea.vmem %s0, 8
  %v11 = vld [vmem:[%s10] sm:$0xff]
  %s12 = scalar_lea.vmem %s1, 4
  %13 = vst [vmem:[%s12] ss:$8 sm:$0x3] %v11
  %s14 = scalar_lea.vmem %s1, 4294967285
  %15 = vst [vmem:[%s14] ss:$8 sm:$0xc] %v11
  %s16 = scalar_lea.vmem %s1, 4294967270
  %17 = vst [vmem:[%s16] ss:$8 sm:$0x30] %v11
  %s18 = scalar_lea.vmem %s1, 4294967255
  %19 = vst [vmem:[%s18] ss:$8 sm:$0xc0] %v11

// kernel: _lambda_.16
$region0: #{_lambda_.16}
  #allocation0 [shape = 'u32[]', space=smem, size = 0x4, offset = 0x4, fixed_abs, tag = 'smem constant byte address 0x4 - core index']
  #allocation1 [shape = 'u32[144,128]{1,0:T(1,128)}', space=vmem, size = 0x12000, scoped, tag = 'internal scratch']
  %s0 = inlined_call_operand.vmem [shape: f32[8,256], index: 0, kind: input, shape index: {}]
  %s1 = inlined_call_operand.vmem [shape: f32[8,256], index: 1, kind: input, shape index: {}, may-alias: {1,2}]
  %s2 = inlined_call_operand.vmem [shape: f32[8,256], index: 2, kind: output, shape index: {0}, may-alias: {1,2}]
  %s3 = inlined_call_operand.vmem [shape: f32[8,256], index: 3, kind: output, shape index: {1}]
  %4 = xla_tuple %s2, %s3
  %s5 = sld [smem:[#allocation0]]
  $region26: #{_lambda_.16} parent=0
    _
  %s7 = ssub.s32 1, %s5
  %s8 = scalar_select 0, %s7, %s5
  // Predicated region
  $region2: #{_lambda_.16} parent=0 // pred_check
    _
  $region3: #{_lambda_.16} parent=0 // pred_check_branch
    %10 = sbr.rel (0) target = $region5
  $region4: #{_lambda_.16} parent=0 // pred_region
    _
  $region5: #{_lambda_.16} parent=0 // pred_fallthru
    _
  // Predicated region
  $region6: #{_lambda_.16} parent=0 // pred_check
    _
  $region7: #{_lambda_.16} parent=0 // pred_check_branch
    %12 = sbr.rel (0) target = $region9
  $region8: #{_lambda_.16} parent=0 // pred_region
    _
  $region9: #{_lambda_.16} parent=0 // pred_fallthru
    _
  %v13 = vld [vmem:[%s0] sm:$0xff]
  %v14 = vld [vmem:[%s0 + $0x8] sm:$0xff]
  %v15 = vmul.f32 %v13, 1.7711965
  %v16 = vmul.f32 %v14, 1.7711965
  %v17 = vld [vmem:[%s1] sm:$0xff]
  %v18 = vld [vmem:[%s1 + $0x8] sm:$0xff]
  %v19 = vmul.f32 %v17, 0.20762555
  %v20 = vmul.f32 %v18, 0.20762555
  %v21 = vadd.f32 %v15, %v19
  %v22 = vadd.f32 %v16, %v20
  %23 = vst [vmem:[%s2] sm:$0xff] %v21
  %24 = vst [vmem:[%s2 + $0x8] sm:$0xff] %v22
  %v25 = vmul.f32 %v21, 0.55322224
  %v26 = vmul.f32 %v22, 0.55322224
  %27 = vst [vmem:[%s3] sm:$0xff] %v25
  %28 = vst [vmem:[%s3 + $0x8] sm:$0xff] %v26
  // Predicated region
  $region10: #{_lambda_.16} parent=0 // pred_check
    _
  $region11: #{_lambda_.16} parent=0 // pred_check_branch
    %30 = sbr.rel (0) target = $region13
  $region12: #{_lambda_.16} parent=0 // pred_region
    _
  $region13: #{_lambda_.16} parent=0 // pred_fallthru
    _
  // Predicated region
  $region14: #{_lambda_.16} parent=0 // pred_check
    _
  $region15: #{_lambda_.16} parent=0 // pred_check_branch
    %32 = sbr.rel (0) target = $region17
  $region16: #{_lambda_.16} parent=0 // pred_region
    _
  $region17: #{_lambda_.16} parent=0 // pred_fallthru
    _
  // Predicated region
  $region18: #{_lambda_.16} parent=0 // pred_check
    _
  $region19: #{_lambda_.16} parent=0 // pred_check_branch
    %34 = sbr.rel (0) target = $region21
  $region20: #{_lambda_.16} parent=0 // pred_region
    _
  $region21: #{_lambda_.16} parent=0 // pred_fallthru
    _
  // Predicated region
  $region22: #{_lambda_.16} parent=0 // pred_check
    _
  $region23: #{_lambda_.16} parent=0 // pred_check_branch
    %36 = sbr.rel (0) target = $region25
  $region24: #{_lambda_.16} parent=0 // pred_region
    _
  $region25: #{_lambda_.16} parent=0 // pred_fallthru
    _

// kernel: _lambda_.18
$region0: #{_lambda_.18}
  #allocation0 [shape = 'u32[]', space=smem, size = 0x4, offset = 0x4, fixed_abs, tag = 'smem constant byte address 0x4 - core index']
  #allocation1 [shape = 'u32[144,128]{1,0:T(1,128)}', space=vmem, size = 0x12000, scoped, tag = 'internal scratch']
  %s0 = inlined_call_operand.vmem [shape: f32[8,256], index: 0, kind: input, shape index: {}]
  %s1 = inlined_call_operand.vmem [shape: f32[8,256], index: 1, kind: input, shape index: {}, may-alias: {1,2}]
  %s2 = inlined_call_operand.vmem [shape: f32[8,256], index: 2, kind: output, shape index: {0}, may-alias: {1,2}]
  %s3 = inlined_call_operand.vmem [shape: f32[8,256], index: 3, kind: output, shape index: {1}]
  %4 = xla_tuple %s2, %s3
  %s5 = sld [smem:[#allocation0]]
  $region26: #{_lambda_.18} parent=0
    _
  %s7 = ssub.s32 1, %s5
  %s8 = scalar_select 0, %s7, %s5
  // Predicated region
  $region2: #{_lambda_.18} parent=0 // pred_check
    _
  $region3: #{_lambda_.18} parent=0 // pred_check_branch
    %10 = sbr.rel (0) target = $region5
  $region4: #{_lambda_.18} parent=0 // pred_region
    _
  $region5: #{_lambda_.18} parent=0 // pred_fallthru
    _
  // Predicated region
  $region6: #{_lambda_.18} parent=0 // pred_check
    _
  $region7: #{_lambda_.18} parent=0 // pred_check_branch
    %12 = sbr.rel (0) target = $region9
  $region8: #{_lambda_.18} parent=0 // pred_region
    _
  $region9: #{_lambda_.18} parent=0 // pred_fallthru
    _
  %v13 = vld [vmem:[%s0] sm:$0xff]
  %v14 = vld [vmem:[%s0 + $0x8] sm:$0xff]
  %v15 = vmul.f32 %v13, 0.62917215
  %v16 = vmul.f32 %v14, 0.62917215
  %v17 = vld [vmem:[%s1] sm:$0xff]
  %v18 = vld [vmem:[%s1 + $0x8] sm:$0xff]
  %v19 = vmul.f32 %v17, 0.20104907
  %v20 = vmul.f32 %v18, 0.20104907
  %v21 = vadd.f32 %v15, %v19
  %v22 = vadd.f32 %v16, %v20
  %23 = vst [vmem:[%s2] sm:$0xff] %v21
  %24 = vst [vmem:[%s2 + $0x8] sm:$0xff] %v22
  %v25 = vmul.f32 %v21, 1.1931472
  %v26 = vmul.f32 %v22, 1.1931472
  %27 = vst [vmem:[%s3] sm:$0xff] %v25
  %28 = vst [vmem:[%s3 + $0x8] sm:$0xff] %v26
  // Predicated region
  $region10: #{_lambda_.18} parent=0 // pred_check
    _
  $region11: #{_lambda_.18} parent=0 // pred_check_branch
    %30 = sbr.rel (0) target = $region13
  $region12: #{_lambda_.18} parent=0 // pred_region
    _
  $region13: #{_lambda_.18} parent=0 // pred_fallthru
    _
  // Predicated region
  $region14: #{_lambda_.18} parent=0 // pred_check
    _
  $region15: #{_lambda_.18} parent=0 // pred_check_branch
    %32 = sbr.rel (0) target = $region17
  $region16: #{_lambda_.18} parent=0 // pred_region
    _
  $region17: #{_lambda_.18} parent=0 // pred_fallthru
    _
  // Predicated region
  $region18: #{_lambda_.18} parent=0 // pred_check
    _
  $region19: #{_lambda_.18} parent=0 // pred_check_branch
    %34 = sbr.rel (0) target = $region21
  $region20: #{_lambda_.18} parent=0 // pred_region
    _
  $region21: #{_lambda_.18} parent=0 // pred_fallthru
    _
  // Predicated region
  $region22: #{_lambda_.18} parent=0 // pred_check
    _
  $region23: #{_lambda_.18} parent=0 // pred_check_branch
    %36 = sbr.rel (0) target = $region25
  $region24: #{_lambda_.18} parent=0 // pred_region
    _
  $region25: #{_lambda_.18} parent=0 // pred_fallthru
    _

// kernel: _lambda_.17
$region0: #{_lambda_.17}
  #allocation0 [shape = 'u32[]', space=smem, size = 0x4, offset = 0x4, fixed_abs, tag = 'smem constant byte address 0x4 - core index']
  #allocation1 [shape = 'u32[144,128]{1,0:T(1,128)}', space=vmem, size = 0x12000, scoped, tag = 'internal scratch']
  %s0 = inlined_call_operand.vmem [shape: f32[8,256], index: 0, kind: input, shape index: {}, may-alias: {0,4}]
  %s1 = inlined_call_operand.vmem [shape: f32[8,256], index: 1, kind: input, shape index: {}]
  %s2 = inlined_call_operand.vmem [shape: f32[8,256], index: 2, kind: input, shape index: {}]
  %s3 = inlined_call_operand.vmem [shape: f32[8,256], index: 3, kind: input, shape index: {}]
  %s4 = inlined_call_operand.vmem [shape: f32[8,256], index: 4, kind: output, shape index: {0}, may-alias: {0,4}]
  %s5 = inlined_call_operand.vmem [shape: f32[8,256], index: 5, kind: output, shape index: {1}]
  %6 = xla_tuple %s4, %s5
  %s7 = sld [smem:[#allocation0]]
  $region34: #{_lambda_.17} parent=0
    _
  %s9 = ssub.s32 1, %s7
  %s10 = scalar_select 0, %s9, %s7
  // Predicated region
  $region2: #{_lambda_.17} parent=0 // pred_check
    _
  $region3: #{_lambda_.17} parent=0 // pred_check_branch
    %12 = sbr.rel (0) target = $region5
  $region4: #{_lambda_.17} parent=0 // pred_region
    _
  $region5: #{_lambda_.17} parent=0 // pred_fallthru
    _
  // Predicated region
  $region6: #{_lambda_.17} parent=0 // pred_check
    _
  $region7: #{_lambda_.17} parent=0 // pred_check_branch
    %14 = sbr.rel (0) target = $region9
  $region8: #{_lambda_.17} parent=0 // pred_region
    _
  $region9: #{_lambda_.17} parent=0 // pred_fallthru
    _
  // Predicated region
  $region10: #{_lambda_.17} parent=0 // pred_check
    _
  $region11: #{_lambda_.17} parent=0 // pred_check_branch
    %16 = sbr.rel (0) target = $region13
  $region12: #{_lambda_.17} parent=0 // pred_region
    _
  $region13: #{_lambda_.17} parent=0 // pred_fallthru
    _
  // Predicated region
  $region14: #{_lambda_.17} parent=0 // pred_check
    _
  $region15: #{_lambda_.17} parent=0 // pred_check_branch
    %18 = sbr.rel (0) target = $region17
  $region16: #{_lambda_.17} parent=0 // pred_region
    _
  $region17: #{_lambda_.17} parent=0 // pred_fallthru
    _
  %v19 = vld [vmem:[%s0] sm:$0xff]
  %v20 = vld [vmem:[%s0 + $0x8] sm:$0xff]
  %v21 = vmul.f32 %v19, 3.0
  %v22 = vmul.f32 %v20, 3.0
  %v23 = vld [vmem:[%s1] sm:$0xff]
  %v24 = vld [vmem:[%s1 + $0x8] sm:$0xff]
  %v25 = vmul.f32 %v23, -1.342847
  %v26 = vmul.f32 %v24, -1.342847
  %v27 = vadd.f32 %v21, %v25
  %v28 = vadd.f32 %v22, %v26
  %v29 = vld [vmem:[%s2] sm:$0xff]
  %v30 = vld [vmem:[%s2 + $0x8] sm:$0xff]
  %v31 = vmul.f32 %v29, 0.6986848
  %v32 = vmul.f32 %v30, 0.6986848
  %v33 = vadd.f32 %v27, %v31
  %v34 = vadd.f32 %v28, %v32
  %v35 = vld [vmem:[%s3] sm:$0xff]
  %v36 = vld [vmem:[%s3 + $0x8] sm:$0xff]
  %v37 = vmul.f32 %v35, 1.0943413
  %v38 = vmul.f32 %v36, 1.0943413
  %v39 = vadd.f32 %v33, %v37
  %v40 = vadd.f32 %v34, %v38
  %41 = vst [vmem:[%s4] sm:$0xff] %v39
  %42 = vst [vmem:[%s4 + $0x8] sm:$0xff] %v40
  %v43 = vmul.f32 %v39, 0.7732728
  %v44 = vmul.f32 %v40, 0.7732728
  %45 = vst [vmem:[%s5] sm:$0xff] %v43
  %46 = vst [vmem:[%s5 + $0x8] sm:$0xff] %v44
  // Predicated region
  $region18: #{_lambda_.17} parent=0 // pred_check
    _
  $region19: #{_lambda_.17} parent=0 // pred_check_branch
    %48 = sbr.rel (0) target = $region21
  $region20: #{_lambda_.17} parent=0 // pred_region
    _
  $region21: #{_lambda_.17} parent=0 // pred_fallthru
    _
  // Predicated region
  $region22: #{_lambda_.17} parent=0 // pred_check
    _
  $region23: #{_lambda_.17} parent=0 // pred_check_branch
    %50 = sbr.rel (0) target = $region25
  $region24: #{_lambda_.17} parent=0 // pred_region
    _
  $region25: #{_lambda_.17} parent=0 // pred_fallthru
    _
  // Predicated region
  $region26: #{_lambda_.17} parent=0 // pred_check
    _
  $region27: #{_lambda_.17} parent=0 // pred_check_branch
    %52 = sbr.rel (0) target = $region29
  $region28: #{_lambda_.17} parent=0 // pred_region
    _
  $region29: #{_lambda_.17} parent=0 // pred_fallthru
    _
  // Predicated region
  $region30: #{_lambda_.17} parent=0 // pred_check
    _
  $region31: #{_lambda_.17} parent=0 // pred_check_branch
    %54 = sbr.rel (0) target = $region33
  $region32: #{_lambda_.17} parent=0 // pred_region
    _
  $region33: #{_lambda_.17} parent=0 // pred_fallthru
    _

// kernel: _lambda_.19
$region0: #{_lambda_.19}
  #allocation0 [shape = 'u32[]', space=smem, size = 0x4, offset = 0x4, fixed_abs, tag = 'smem constant byte address 0x4 - core index']
  #allocation1 [shape = 'u32[144,128]{1,0:T(1,128)}', space=vmem, size = 0x12000, scoped, tag = 'internal scratch']
  %s0 = inlined_call_operand.vmem [shape: f32[8,256], index: 0, kind: input, shape index: {}, may-alias: {0,4}]
  %s1 = inlined_call_operand.vmem [shape: f32[8,256], index: 1, kind: input, shape index: {}]
  %s2 = inlined_call_operand.vmem [shape: f32[8,256], index: 2, kind: input, shape index: {}]
  %s3 = inlined_call_operand.vmem [shape: f32[8,256], index: 3, kind: input, shape index: {}]
  %s4 = inlined_call_operand.vmem [shape: f32[8,256], index: 4, kind: output, shape index: {0}, may-alias: {0,4}]
  %s5 = inlined_call_operand.vmem [shape: f32[8,256], index: 5, kind: output, shape index: {1}]
  %6 = xla_tuple %s4, %s5
  %s7 = sld [smem:[#allocation0]]
  $region34: #{_lambda_.19} parent=0
    _
  %s9 = ssub.s32 1, %s7
  %s10 = scalar_select 0, %s9, %s7
  // Predicated region
  $region2: #{_lambda_.19} parent=0 // pred_check
    _
  $region3: #{_lambda_.19} parent=0 // pred_check_branch
    %12 = sbr.rel (0) target = $region5
  $region4: #{_lambda_.19} parent=0 // pred_region
    _
  $region5: #{_lambda_.19} parent=0 // pred_fallthru
    _
  // Predicated region
  $region6: #{_lambda_.19} parent=0 // pred_check
    _
  $region7: #{_lambda_.19} parent=0 // pred_check_branch
    %14 = sbr.rel (0) target = $region9
  $region8: #{_lambda_.19} parent=0 // pred_region
    _
  $region9: #{_lambda_.19} parent=0 // pred_fallthru
    _
  // Predicated region
  $region10: #{_lambda_.19} parent=0 // pred_check
    _
  $region11: #{_lambda_.19} parent=0 // pred_check_branch
    %16 = sbr.rel (0) target = $region13
  $region12: #{_lambda_.19} parent=0 // pred_region
    _
  $region13: #{_lambda_.19} parent=0 // pred_fallthru
    _
  // Predicated region
  $region14: #{_lambda_.19} parent=0 // pred_check
    _
  $region15: #{_lambda_.19} parent=0 // pred_check_branch
    %18 = sbr.rel (0) target = $region17
  $region16: #{_lambda_.19} parent=0 // pred_region
    _
  $region17: #{_lambda_.19} parent=0 // pred_fallthru
    _
  %v19 = vld [vmem:[%s0] sm:$0xff]
  %v20 = vld [vmem:[%s0 + $0x8] sm:$0xff]
  %v21 = vld [vmem:[%s1] sm:$0xff]
  %v22 = vld [vmem:[%s1 + $0x8] sm:$0xff]
  %v23 = vmul.f32 %v21, -0.995864
  %v24 = vmul.f32 %v22, -0.995864
  %v25 = vadd.f32 %v19, %v23
  %v26 = vadd.f32 %v20, %v24
  %v27 = vld [vmem:[%s2] sm:$0xff]
  %v28 = vld [vmem:[%s2 + $0x8] sm:$0xff]
  %v29 = vmul.f32 %v27, 0.6204309
  %v30 = vmul.f32 %v28, 0.6204309
  %v31 = vadd.f32 %v25, %v29
  %v32 = vadd.f32 %v26, %v30
  %v33 = vld [vmem:[%s3] sm:$0xff]
  %v34 = vld [vmem:[%s3 + $0x8] sm:$0xff]
  %v35 = vmul.f32 %v33, 0.39843312
  %v36 = vmul.f32 %v34, 0.39843312
  %v37 = vadd.f32 %v31, %v35
  %v38 = vadd.f32 %v32, %v36
  %39 = vst [vmem:[%s4] sm:$0xff] %v37
  %40 = vst [vmem:[%s4 + $0x8] sm:$0xff] %v38
  %v41 = vmul.f32 %v37, 1.5213647
  %v42 = vmul.f32 %v38, 1.5213647
  %43 = vst [vmem:[%s5] sm:$0xff] %v41
  %44 = vst [vmem:[%s5 + $0x8] sm:$0xff] %v42
  // Predicated region
  $region18: #{_lambda_.19} parent=0 // pred_check
    _
  $region19: #{_lambda_.19} parent=0 // pred_check_branch
    %46 = sbr.rel (0) target = $region21
  $region20: #{_lambda_.19} parent=0 // pred_region
    _
  $region21: #{_lambda_.19} parent=0 // pred_fallthru
    _
  // Predicated region
  $region22: #{_lambda_.19} parent=0 // pred_check
    _
  $region23: #{_lambda_.19} parent=0 // pred_check_branch
    %48 = sbr.rel (0) target = $region25
  $region24: #{_lambda_.19} parent=0 // pred_region
    _
  $region25: #{_lambda_.19} parent=0 // pred_fallthru
    _
  // Predicated region
  $region26: #{_lambda_.19} parent=0 // pred_check
    _
  $region27: #{_lambda_.19} parent=0 // pred_check_branch
    %50 = sbr.rel (0) target = $region29
  $region28: #{_lambda_.19} parent=0 // pred_region
    _
  $region29: #{_lambda_.19} parent=0 // pred_fallthru
    _
  // Predicated region
  $region30: #{_lambda_.19} parent=0 // pred_check
    _
  $region31: #{_lambda_.19} parent=0 // pred_check_branch
    %52 = sbr.rel (0) target = $region33
  $region32: #{_lambda_.19} parent=0 // pred_region
    _
  $region33: #{_lambda_.19} parent=0 // pred_fallthru
    _

// kernel: _lambda_.20
$region0: #{_lambda_.20}
  #allocation0 [shape = 'u32[]', space=smem, size = 0x4, offset = 0x4, fixed_abs, tag = 'smem constant byte address 0x4 - core index']
  #allocation1 [shape = 'u32[144,128]{1,0:T(1,128)}', space=vmem, size = 0x12000, scoped, tag = 'internal scratch']
  %s0 = inlined_call_operand.vmem [shape: f32[8,256], index: 0, kind: input, shape index: {}]
  %s1 = inlined_call_operand.vmem [shape: f32[8,256], index: 1, kind: input, shape index: {}, may-alias: {1,2}]
  %s2 = inlined_call_operand.vmem [shape: f32[8,256], index: 2, kind: output, shape index: {0}, may-alias: {1,2}]
  %s3 = inlined_call_operand.vmem [shape: f32[8,256], index: 3, kind: output, shape index: {1}]
  %4 = xla_tuple %s2, %s3
  %s5 = sld [smem:[#allocation0]]
  $region26: #{_lambda_.20} parent=0
    _
  %s7 = ssub.s32 1, %s5
  %s8 = scalar_select 0, %s7, %s5
  // Predicated region
  $region2: #{_lambda_.20} parent=0 // pred_check
    _
  $region3: #{_lambda_.20} parent=0 // pred_check_branch
    %10 = sbr.rel (0) target = $region5
  $region4: #{_lambda_.20} parent=0 // pred_region
    _
  $region5: #{_lambda_.20} parent=0 // pred_fallthru
    _
  // Predicated region
  $region6: #{_lambda_.20} parent=0 // pred_check
    _
  $region7: #{_lambda_.20} parent=0 // pred_check_branch
    %12 = sbr.rel (0) target = $region9
  $region8: #{_lambda_.20} parent=0 // pred_region
    _
  $region9: #{_lambda_.20} parent=0 // pred_fallthru
    _
  %v13 = vld [vmem:[%s0] sm:$0xff]
  %v14 = vld [vmem:[%s0 + $0x8] sm:$0xff]
  %v15 = vmul.f32 %v13, 0.80999744
  %v16 = vmul.f32 %v14, 0.80999744
  %v17 = vld [vmem:[%s1] sm:$0xff]
  %v18 = vld [vmem:[%s1 + $0x8] sm:$0xff]
  %v19 = vmul.f32 %v17, 0.146353
  %v20 = vmul.f32 %v18, 0.146353
  %v21 = vadd.f32 %v15, %v19
  %v22 = vadd.f32 %v16, %v20
  %23 = vst [vmem:[%s2] sm:$0xff] %v21
  %24 = vst [vmem:[%s2 + $0x8] sm:$0xff] %v22
  %v25 = vmul.f32 %v21, 1.8110565
  %v26 = vmul.f32 %v22, 1.8110565
  %27 = vst [vmem:[%s3] sm:$0xff] %v25
  %28 = vst [vmem:[%s3 + $0x8] sm:$0xff] %v26
  // Predicated region
  $region10: #{_lambda_.20} parent=0 // pred_check
    _
  $region11: #{_lambda_.20} parent=0 // pred_check_branch
    %30 = sbr.rel (0) target = $region13
  $region12: #{_lambda_.20} parent=0 // pred_region
    _
  $region13: #{_lambda_.20} parent=0 // pred_fallthru
    _
  // Predicated region
  $region14: #{_lambda_.20} parent=0 // pred_check
    _
  $region15: #{_lambda_.20} parent=0 // pred_check_branch
    %32 = sbr.rel (0) target = $region17
  $region16: #{_lambda_.20} parent=0 // pred_region
    _
  $region17: #{_lambda_.20} parent=0 // pred_fallthru
    _
  // Predicated region
  $region18: #{_lambda_.20} parent=0 // pred_check
    _
  $region19: #{_lambda_.20} parent=0 // pred_check_branch
    %34 = sbr.rel (0) target = $region21
  $region20: #{_lambda_.20} parent=0 // pred_region
    _
  $region21: #{_lambda_.20} parent=0 // pred_fallthru
    _
  // Predicated region
  $region22: #{_lambda_.20} parent=0 // pred_check
    _
  $region23: #{_lambda_.20} parent=0 // pred_check_branch
    %36 = sbr.rel (0) target = $region25
  $region24: #{_lambda_.20} parent=0 // pred_region
    _
  $region25: #{_lambda_.20} parent=0 // pred_fallthru
    _

// kernel: _lambda_.21
$region0: #{_lambda_.21}
  #allocation0 [shape = 'u32[]', space=smem, size = 0x4, offset = 0x4, fixed_abs, tag = 'smem constant byte address 0x4 - core index']
  #allocation1 [shape = 'u32[144,128]{1,0:T(1,128)}', space=vmem, size = 0x12000, scoped, tag = 'internal scratch']
  %s0 = inlined_call_operand.vmem [shape: f32[8,256], index: 0, kind: input, shape index: {}, may-alias: {0,4}]
  %s1 = inlined_call_operand.vmem [shape: f32[8,256], index: 1, kind: input, shape index: {}]
  %s2 = inlined_call_operand.vmem [shape: f32[8,256], index: 2, kind: input, shape index: {}]
  %s3 = inlined_call_operand.vmem [shape: f32[8,256], index: 3, kind: input, shape index: {}]
  %s4 = inlined_call_operand.vmem [shape: f32[8,256], index: 4, kind: output, shape index: {0}, may-alias: {0,4}]
  %s5 = inlined_call_operand.vmem [shape: f32[8,256], index: 5, kind: output, shape index: {1}]
  %6 = xla_tuple %s4, %s5
  %s7 = sld [smem:[#allocation0]]
  $region34: #{_lambda_.21} parent=0
    _
  %s9 = ssub.s32 1, %s7
  %s10 = scalar_select 0, %s9, %s7
  // Predicated region
  $region2: #{_lambda_.21} parent=0 // pred_check
    _
  $region3: #{_lambda_.21} parent=0 // pred_check_branch
    %12 = sbr.rel (0) target = $region5
  $region4: #{_lambda_.21} parent=0 // pred_region
    _
  $region5: #{_lambda_.21} parent=0 // pred_fallthru
    _
  // Predicated region
  $region6: #{_lambda_.21} parent=0 // pred_check
    _
  $region7: #{_lambda_.21} parent=0 // pred_check_branch
    %14 = sbr.rel (0) target = $region9
  $region8: #{_lambda_.21} parent=0 // pred_region
    _
  $region9: #{_lambda_.21} parent=0 // pred_fallthru
    _
  // Predicated region
  $region10: #{_lambda_.21} parent=0 // pred_check
    _
  $region11: #{_lambda_.21} parent=0 // pred_check_branch
    %16 = sbr.rel (0) target = $region13
  $region12: #{_lambda_.21} parent=0 // pred_region
    _
  $region13: #{_lambda_.21} parent=0 // pred_fallthru
    _
  // Predicated region
  $region14: #{_lambda_.21} parent=0 // pred_check
    _
  $region15: #{_lambda_.21} parent=0 // pred_check_branch
    %18 = sbr.rel (0) target = $region17
  $region16: #{_lambda_.21} parent=0 // pred_region
    _
  $region17: #{_lambda_.21} parent=0 // pred_fallthru
    _
  %v19 = vld [vmem:[%s0] sm:$0xff]
  %v20 = vld [vmem:[%s0 + $0x8] sm:$0xff]
  %v21 = vld [vmem:[%s1] sm:$0xff]
  %v22 = vld [vmem:[%s1 + $0x8] sm:$0xff]
  %v23 = vmul.f32 %v21, -0.29567796
  %v24 = vmul.f32 %v22, -0.29567796
  %v25 = vadd.f32 %v19, %v23
  %v26 = vadd.f32 %v20, %v24
  %v27 = vld [vmem:[%s2] sm:$0xff]
  %v28 = vld [vmem:[%s2 + $0x8] sm:$0xff]
  %v29 = vmul.f32 %v27, 0.34844184
  %v30 = vmul.f32 %v28, 0.34844184
  %v31 = vadd.f32 %v25, %v29
  %v32 = vadd.f32 %v26, %v30
  %v33 = vld [vmem:[%s3] sm:$0xff]
  %v34 = vld [vmem:[%s3 + $0x8] sm:$0xff]
  %v35 = vmul.f32 %v33, 0.1269431
  %v36 = vmul.f32 %v34, 0.1269431
  %v37 = vadd.f32 %v31, %v35
  %v38 = vadd.f32 %v32, %v36
  %39 = vst [vmem:[%s4] sm:$0xff] %v37
  %40 = vst [vmem:[%s4 + $0x8] sm:$0xff] %v38
  %v41 = vmul.f32 %v37, 1.9321432
  %v42 = vmul.f32 %v38, 1.9321432
  %43 = vst [vmem:[%s5] sm:$0xff] %v41
  %44 = vst [vmem:[%s5 + $0x8] sm:$0xff] %v42
  // Predicated region
  $region18: #{_lambda_.21} parent=0 // pred_check
    _
  $region19: #{_lambda_.21} parent=0 // pred_check_branch
    %46 = sbr.rel (0) target = $region21
  $region20: #{_lambda_.21} parent=0 // pred_region
    _
  $region21: #{_lambda_.21} parent=0 // pred_fallthru
    _
  // Predicated region
  $region22: #{_lambda_.21} parent=0 // pred_check
    _
  $region23: #{_lambda_.21} parent=0 // pred_check_branch
    %48 = sbr.rel (0) target = $region25
  $region24: #{_lambda_.21} parent=0 // pred_region
    _
  $region25: #{_lambda_.21} parent=0 // pred_fallthru
    _
  // Predicated region
  $region26: #{_lambda_.21} parent=0 // pred_check
    _
  $region27: #{_lambda_.21} parent=0 // pred_check_branch
    %50 = sbr.rel (0) target = $region29
  $region28: #{_lambda_.21} parent=0 // pred_region
    _
  $region29: #{_lambda_.21} parent=0 // pred_fallthru
    _
  // Predicated region
  $region30: #{_lambda_.21} parent=0 // pred_check
    _
  $region31: #{_lambda_.21} parent=0 // pred_check_branch
    %52 = sbr.rel (0) target = $region33
  $region32: #{_lambda_.21} parent=0 // pred_region
    _
  $region33: #{_lambda_.21} parent=0 // pred_fallthru
    _

// kernel: _lambda_.22
$region0: #{_lambda_.22}
  #allocation0 [shape = 'u32[]', space=smem, size = 0x4, offset = 0x4, fixed_abs, tag = 'smem constant byte address 0x4 - core index']
  #allocation1 [shape = 'u32[144,128]{1,0:T(1,128)}', space=vmem, size = 0x12000, scoped, tag = 'internal scratch']
  %s0 = inlined_call_operand.vmem [shape: f32[8,256], index: 0, kind: input, shape index: {}]
  %s1 = inlined_call_operand.vmem [shape: f32[8,256], index: 1, kind: input, shape index: {}, may-alias: {1,2}]
  %s2 = inlined_call_operand.vmem [shape: f32[8,256], index: 2, kind: output, shape index: {0}, may-alias: {1,2}]
  %s3 = inlined_call_operand.vmem [shape: f32[8,256], index: 3, kind: output, shape index: {1}]
  %4 = xla_tuple %s2, %s3
  %s5 = sld [smem:[#allocation0]]
  $region26: #{_lambda_.22} parent=0
    _
  %s7 = ssub.s32 1, %s5
  %s8 = scalar_select 0, %s7, %s5
  // Predicated region
  $region2: #{_lambda_.22} parent=0 // pred_check
    _
  $region3: #{_lambda_.22} parent=0 // pred_check_branch
    %10 = sbr.rel (0) target = $region5
  $region4: #{_lambda_.22} parent=0 // pred_region
    _
  $region5: #{_lambda_.22} parent=0 // pred_fallthru
    _
  // Predicated region
  $region6: #{_lambda_.22} parent=0 // pred_check
    _
  $region7: #{_lambda_.22} parent=0 // pred_check_branch
    %12 = sbr.rel (0) target = $region9
  $region8: #{_lambda_.22} parent=0 // pred_region
    _
  $region9: #{_lambda_.22} parent=0 // pred_fallthru
    _
  %v13 = vld [vmem:[%s0] sm:$0xff]
  %v14 = vld [vmem:[%s0 + $0x8] sm:$0xff]
  %v15 = vmul.f32 %v13, 0.96896726
  %v16 = vmul.f32 %v14, 0.96896726
  %v17 = vld [vmem:[%s1] sm:$0xff]
  %v18 = vld [vmem:[%s1 + $0x8] sm:$0xff]
  %v19 = vmul.f32 %v17, 0.060077097
  %v20 = vmul.f32 %v18, 0.060077097
  %v21 = vadd.f32 %v15, %v19
  %v22 = vadd.f32 %v16, %v20
  %23 = vst [vmem:[%s2] sm:$0xff] %v21
  %24 = vst [vmem:[%s2 + $0x8] sm:$0xff] %v22
  %v25 = vmul.f32 %v21, 1.9798673
  %v26 = vmul.f32 %v22, 1.9798673
  %27 = vst [vmem:[%s3] sm:$0xff] %v25
  %28 = vst [vmem:[%s3 + $0x8] sm:$0xff] %v26
  // Predicated region
  $region10: #{_lambda_.22} parent=0 // pred_check
    _
  $region11: #{_lambda_.22} parent=0 // pred_check_branch
    %30 = sbr.rel (0) target = $region13
  $region12: #{_lambda_.22} parent=0 // pred_region
    _
  $region13: #{_lambda_.22} parent=0 // pred_fallthru
    _
  // Predicated region
  $region14: #{_lambda_.22} parent=0 // pred_check
    _
  $region15: #{_lambda_.22} parent=0 // pred_check_branch
    %32 = sbr.rel (0) target = $region17
  $region16: #{_lambda_.22} parent=0 // pred_region
    _
  $region17: #{_lambda_.22} parent=0 // pred_fallthru
    _
  // Predicated region
  $region18: #{_lambda_.22} parent=0 // pred_check
    _
  $region19: #{_lambda_.22} parent=0 // pred_check_branch
    %34 = sbr.rel (0) target = $region21
  $region20: #{_lambda_.22} parent=0 // pred_region
    _
  $region21: #{_lambda_.22} parent=0 // pred_fallthru
    _
  // Predicated region
  $region22: #{_lambda_.22} parent=0 // pred_check
    _
  $region23: #{_lambda_.22} parent=0 // pred_check_branch
    %36 = sbr.rel (0) target = $region25
  $region24: #{_lambda_.22} parent=0 // pred_region
    _
  $region25: #{_lambda_.22} parent=0 // pred_fallthru
    _

// kernel: _lambda_.23
$region0: #{_lambda_.23}
  #allocation0 [shape = 'u32[]', space=smem, size = 0x4, offset = 0x4, fixed_abs, tag = 'smem constant byte address 0x4 - core index']
  #allocation1 [shape = 'u32[144,128]{1,0:T(1,128)}', space=vmem, size = 0x12000, scoped, tag = 'internal scratch']
  %s0 = inlined_call_operand.vmem [shape: f32[8,256], index: 0, kind: input, shape index: {}, may-alias: {0,4}]
  %s1 = inlined_call_operand.vmem [shape: f32[8,256], index: 1, kind: input, shape index: {}]
  %s2 = inlined_call_operand.vmem [shape: f32[8,256], index: 2, kind: input, shape index: {}]
  %s3 = inlined_call_operand.vmem [shape: f32[8,256], index: 3, kind: input, shape index: {}]
  %s4 = inlined_call_operand.vmem [shape: f32[8,256], index: 4, kind: output, shape index: {0}, may-alias: {0,4}]
  %s5 = inlined_call_operand.vmem [shape: f32[8,256], index: 5, kind: output, shape index: {1}]
  %6 = xla_tuple %s4, %s5
  %s7 = sld [smem:[#allocation0]]
  $region34: #{_lambda_.23} parent=0
    _
  %s9 = ssub.s32 1, %s7
  %s10 = scalar_select 0, %s9, %s7
  // Predicated region
  $region2: #{_lambda_.23} parent=0 // pred_check
    _
  $region3: #{_lambda_.23} parent=0 // pred_check_branch
    %12 = sbr.rel (0) target = $region5
  $region4: #{_lambda_.23} parent=0 // pred_region
    _
  $region5: #{_lambda_.23} parent=0 // pred_fallthru
    _
  // Predicated region
  $region6: #{_lambda_.23} parent=0 // pred_check
    _
  $region7: #{_lambda_.23} parent=0 // pred_check_branch
    %14 = sbr.rel (0) target = $region9
  $region8: #{_lambda_.23} parent=0 // pred_region
    _
  $region9: #{_lambda_.23} parent=0 // pred_fallthru
    _
  // Predicated region
  $region10: #{_lambda_.23} parent=0 // pred_check
    _
  $region11: #{_lambda_.23} parent=0 // pred_check_branch
    %16 = sbr.rel (0) target = $region13
  $region12: #{_lambda_.23} parent=0 // pred_region
    _
  $region13: #{_lambda_.23} parent=0 // pred_fallthru
    _
  // Predicated region
  $region14: #{_lambda_.23} parent=0 // pred_check
    _
  $region15: #{_lambda_.23} parent=0 // pred_check_branch
    %18 = sbr.rel (0) target = $region17
  $region16: #{_lambda_.23} parent=0 // pred_region
    _
  $region17: #{_lambda_.23} parent=0 // pred_fallthru
    _
  %v19 = vld [vmem:[%s0] sm:$0xff]
  %v20 = vld [vmem:[%s0 + $0x8] sm:$0xff]
  %v21 = vld [vmem:[%s1] sm:$0xff]
  %v22 = vld [vmem:[%s1 + $0x8] sm:$0xff]
  %v23 = vmul.f32 %v21, -0.03485138
  %v24 = vmul.f32 %v22, -0.03485138
  %v25 = vadd.f32 %v19, %v23
  %v26 = vadd.f32 %v20, %v24
  %v27 = vld [vmem:[%s2] sm:$0xff]
  %v28 = vld [vmem:[%s2 + $0x8] sm:$0xff]
  %v29 = vmul.f32 %v27, 0.12312202
  %v30 = vmul.f32 %v28, 0.12312202
  %v31 = vadd.f32 %v25, %v29
  %v32 = vadd.f32 %v26, %v30
  %v33 = vld [vmem:[%s3] sm:$0xff]
  %v34 = vld [vmem:[%s3 + $0x8] sm:$0xff]
  %v35 = vmul.f32 %v33, 0.03400728
  %v36 = vmul.f32 %v34, 0.03400728
  %v37 = vadd.f32 %v31, %v35
  %v38 = vadd.f32 %v32, %v36
  %39 = vst [vmem:[%s4] sm:$0xff] %v37
  %40 = vst [vmem:[%s4 + $0x8] sm:$0xff] %v38
  %v41 = vmul.f32 %v37, 1.9950466
  %v42 = vmul.f32 %v38, 1.9950466
  %43 = vst [vmem:[%s5] sm:$0xff] %v41
  %44 = vst [vmem:[%s5 + $0x8] sm:$0xff] %v42
  // Predicated region
  $region18: #{_lambda_.23} parent=0 // pred_check
    _
  $region19: #{_lambda_.23} parent=0 // pred_check_branch
    %46 = sbr.rel (0) target = $region21
  $region20: #{_lambda_.23} parent=0 // pred_region
    _
  $region21: #{_lambda_.23} parent=0 // pred_fallthru
    _
  // Predicated region
  $region22: #{_lambda_.23} parent=0 // pred_check
    _
  $region23: #{_lambda_.23} parent=0 // pred_check_branch
    %48 = sbr.rel (0) target = $region25
  $region24: #{_lambda_.23} parent=0 // pred_region
    _
  $region25: #{_lambda_.23} parent=0 // pred_fallthru
    _
  // Predicated region
  $region26: #{_lambda_.23} parent=0 // pred_check
    _
  $region27: #{_lambda_.23} parent=0 // pred_check_branch
    %50 = sbr.rel (0) target = $region29
  $region28: #{_lambda_.23} parent=0 // pred_region
    _
  $region29: #{_lambda_.23} parent=0 // pred_fallthru
    _
  // Predicated region
  $region30: #{_lambda_.23} parent=0 // pred_check
    _
  $region31: #{_lambda_.23} parent=0 // pred_check_branch
    %52 = sbr.rel (0) target = $region33
  $region32: #{_lambda_.23} parent=0 // pred_region
    _
  $region33: #{_lambda_.23} parent=0 // pred_fallthru
    _

// kernel: _lambda_.24
$region0: #{_lambda_.24}
  #allocation0 [shape = 'u32[]', space=smem, size = 0x4, offset = 0x4, fixed_abs, tag = 'smem constant byte address 0x4 - core index']
  #allocation1 [shape = 'u32[144,128]{1,0:T(1,128)}', space=vmem, size = 0x12000, scoped, tag = 'internal scratch']
  %s0 = inlined_call_operand.vmem [shape: f32[8,256], index: 0, kind: input, shape index: {}]
  %s1 = inlined_call_operand.vmem [shape: f32[8,256], index: 1, kind: input, shape index: {}, may-alias: {1,2}]
  %s2 = inlined_call_operand.vmem [shape: f32[8,256], index: 2, kind: output, shape index: {0}, may-alias: {1,2}]
  %s3 = inlined_call_operand.vmem [shape: f32[8,256], index: 3, kind: output, shape index: {1}]
  %4 = xla_tuple %s2, %s3
  %s5 = sld [smem:[#allocation0]]
  $region26: #{_lambda_.24} parent=0
    _
  %s7 = ssub.s32 1, %s5
  %s8 = scalar_select 0, %s7, %s5
  // Predicated region
  $region2: #{_lambda_.24} parent=0 // pred_check
    _
  $region3: #{_lambda_.24} parent=0 // pred_check_branch
    %10 = sbr.rel (0) target = $region5
  $region4: #{_lambda_.24} parent=0 // pred_region
    _
  $region5: #{_lambda_.24} parent=0 // pred_fallthru
    _
  // Predicated region
  $region6: #{_lambda_.24} parent=0 // pred_check
    _
  $region7: #{_lambda_.24} parent=0 // pred_check_branch
    %12 = sbr.rel (0) target = $region9
  $region8: #{_lambda_.24} parent=0 // pred_region
    _
  $region9: #{_lambda_.24} parent=0 // pred_fallthru
    _
  %v13 = vld [vmem:[%s0] sm:$0xff]
  %v14 = vld [vmem:[%s0 + $0x8] sm:$0xff]
  %v15 = vmul.f32 %v13, 0.99763453
  %v16 = vmul.f32 %v14, 0.99763453
  %v17 = vld [vmem:[%s1] sm:$0xff]
  %v18 = vld [vmem:[%s1 + $0x8] sm:$0xff]
  %v19 = vmul.f32 %v17, 0.01681544
  %v20 = vmul.f32 %v18, 0.01681544
  %v21 = vadd.f32 %v15, %v19
  %v22 = vadd.f32 %v16, %v20
  %23 = vst [vmem:[%s2] sm:$0xff] %v21
  %24 = vst [vmem:[%s2 + $0x8] sm:$0xff] %v22
  %v25 = vmul.f32 %v21, 1.9986473
  %v26 = vmul.f32 %v22, 1.9986473
  %27 = vst [vmem:[%s3] sm:$0xff] %v25
  %28 = vst [vmem:[%s3 + $0x8] sm:$0xff] %v26
  // Predicated region
  $region10: #{_lambda_.24} parent=0 // pred_check
    _
  $region11: #{_lambda_.24} parent=0 // pred_check_branch
    %30 = sbr.rel (0) target = $region13
  $region12: #{_lambda_.24} parent=0 // pred_region
    _
  $region13: #{_lambda_.24} parent=0 // pred_fallthru
    _
  // Predicated region
  $region14: #{_lambda_.24} parent=0 // pred_check
    _
  $region15: #{_lambda_.24} parent=0 // pred_check_branch
    %32 = sbr.rel (0) target = $region17
  $region16: #{_lambda_.24} parent=0 // pred_region
    _
  $region17: #{_lambda_.24} parent=0 // pred_fallthru
    _
  // Predicated region
  $region18: #{_lambda_.24} parent=0 // pred_check
    _
  $region19: #{_lambda_.24} parent=0 // pred_check_branch
    %34 = sbr.rel (0) target = $region21
  $region20: #{_lambda_.24} parent=0 // pred_region
    _
  $region21: #{_lambda_.24} parent=0 // pred_fallthru
    _
  // Predicated region
  $region22: #{_lambda_.24} parent=0 // pred_check
    _
  $region23: #{_lambda_.24} parent=0 // pred_check_branch
    %36 = sbr.rel (0) target = $region25
  $region24: #{_lambda_.24} parent=0 // pred_region
    _
  $region25: #{_lambda_.24} parent=0 // pred_fallthru
    _

// kernel: _lambda_.25
$region0: #{_lambda_.25}
  #allocation0 [shape = 'u32[]', space=smem, size = 0x4, offset = 0x4, fixed_abs, tag = 'smem constant byte address 0x4 - core index']
  #allocation1 [shape = 'u32[144,128]{1,0:T(1,128)}', space=vmem, size = 0x12000, scoped, tag = 'internal scratch']
  %s0 = inlined_call_operand.vmem [shape: f32[8,256], index: 0, kind: input, shape index: {}, may-alias: {0,4}]
  %s1 = inlined_call_operand.vmem [shape: f32[8,256], index: 1, kind: input, shape index: {}]
  %s2 = inlined_call_operand.vmem [shape: f32[8,256], index: 2, kind: input, shape index: {}]
  %s3 = inlined_call_operand.vmem [shape: f32[8,256], index: 3, kind: input, shape index: {}]
  %s4 = inlined_call_operand.vmem [shape: f32[8,256], index: 4, kind: output, shape index: {0}, may-alias: {0,4}]
  %s5 = inlined_call_operand.vmem [shape: f32[8,256], index: 5, kind: output, shape index: {1}]
  %6 = xla_tuple %s4, %s5
  %s7 = sld [smem:[#allocation0]]
  $region34: #{_lambda_.25} parent=0
    _
  %s9 = ssub.s32 1, %s7
  %s10 = scalar_select 0, %s9, %s7
  // Predicated region
  $region2: #{_lambda_.25} parent=0 // pred_check
    _
  $region3: #{_lambda_.25} parent=0 // pred_check_branch
    %12 = sbr.rel (0) target = $region5
  $region4: #{_lambda_.25} parent=0 // pred_region
    _
  $region5: #{_lambda_.25} parent=0 // pred_fallthru
    _
  // Predicated region
  $region6: #{_lambda_.25} parent=0 // pred_check
    _
  $region7: #{_lambda_.25} parent=0 // pred_check_branch
    %14 = sbr.rel (0) target = $region9
  $region8: #{_lambda_.25} parent=0 // pred_region
    _
  $region9: #{_lambda_.25} parent=0 // pred_fallthru
    _
  // Predicated region
  $region10: #{_lambda_.25} parent=0 // pred_check
    _
  $region11: #{_lambda_.25} parent=0 // pred_check_branch
    %16 = sbr.rel (0) target = $region13
  $region12: #{_lambda_.25} parent=0 // pred_region
    _
  $region13: #{_lambda_.25} parent=0 // pred_fallthru
    _
  // Predicated region
  $region14: #{_lambda_.25} parent=0 // pred_check
    _
  $region15: #{_lambda_.25} parent=0 // pred_check_branch
    %18 = sbr.rel (0) target = $region17
  $region16: #{_lambda_.25} parent=0 // pred_region
    _
  $region17: #{_lambda_.25} parent=0 // pred_fallthru
    _
  %v19 = vld [vmem:[%s0] sm:$0xff]
  %v20 = vld [vmem:[%s0 + $0x8] sm:$0xff]
  %v21 = vld [vmem:[%s1] sm:$0xff]
  %v22 = vld [vmem:[%s1 + $0x8] sm:$0xff]
  %v23 = vmul.f32 %v21, -0.0024778098
  %v24 = vmul.f32 %v22, -0.0024778098
  %v25 = vadd.f32 %v19, %v23
  %v26 = vadd.f32 %v20, %v24
  %v27 = vld [vmem:[%s2] sm:$0xff]
  %v28 = vld [vmem:[%s2 + $0x8] sm:$0xff]
  %v29 = vmul.f32 %v27, 0.03369158
  %v30 = vmul.f32 %v28, 0.03369158
  %v31 = vadd.f32 %v25, %v29
  %v32 = vadd.f32 %v26, %v30
  %v33 = vld [vmem:[%s3] sm:$0xff]
  %v34 = vld [vmem:[%s3 + $0x8] sm:$0xff]
  %v35 = vmul.f32 %v33, 0.0072084307
  %v36 = vmul.f32 %v34, 0.0072084307
  %v37 = vadd.f32 %v31, %v35
  %v38 = vadd.f32 %v32, %v36
  %39 = vst [vmem:[%s4] sm:$0xff] %v37
  %40 = vst [vmem:[%s4 + $0x8] sm:$0xff] %v38
  %v41 = vmul.f32 %v37, 1.9997827
  %v42 = vmul.f32 %v38, 1.9997827
  %43 = vst [vmem:[%s5] sm:$0xff] %v41
  %44 = vst [vmem:[%s5 + $0x8] sm:$0xff] %v42
  // Predicated region
  $region18: #{_lambda_.25} parent=0 // pred_check
    _
  $region19: #{_lambda_.25} parent=0 // pred_check_branch
    %46 = sbr.rel (0) target = $region21
  $region20: #{_lambda_.25} parent=0 // pred_region
    _
  $region21: #{_lambda_.25} parent=0 // pred_fallthru
    _
  // Predicated region
  $region22: #{_lambda_.25} parent=0 // pred_check
    _
  $region23: #{_lambda_.25} parent=0 // pred_check_branch
    %48 = sbr.rel (0) target = $region25
  $region24: #{_lambda_.25} parent=0 // pred_region
    _
  $region25: #{_lambda_.25} parent=0 // pred_fallthru
    _
  // Predicated region
  $region26: #{_lambda_.25} parent=0 // pred_check
    _
  $region27: #{_lambda_.25} parent=0 // pred_check_branch
    %50 = sbr.rel (0) target = $region29
  $region28: #{_lambda_.25} parent=0 // pred_region
    _
  $region29: #{_lambda_.25} parent=0 // pred_fallthru
    _
  // Predicated region
  $region30: #{_lambda_.25} parent=0 // pred_check
    _
  $region31: #{_lambda_.25} parent=0 // pred_check_branch
    %52 = sbr.rel (0) target = $region33
  $region32: #{_lambda_.25} parent=0 // pred_region
    _
  $region33: #{_lambda_.25} parent=0 // pred_fallthru
    _

// kernel: _lambda_.26
$region0: #{_lambda_.26}
  #allocation0 [shape = 'u32[]', space=smem, size = 0x4, offset = 0x4, fixed_abs, tag = 'smem constant byte address 0x4 - core index']
  #allocation1 [shape = 'u32[144,128]{1,0:T(1,128)}', space=vmem, size = 0x12000, scoped, tag = 'internal scratch']
  %s0 = inlined_call_operand.vmem [shape: f32[8,256], index: 0, kind: input, shape index: {}]
  %s1 = inlined_call_operand.vmem [shape: f32[8,256], index: 1, kind: input, shape index: {}, may-alias: {1,2}]
  %s2 = inlined_call_operand.vmem [shape: f32[8,256], index: 2, kind: output, shape index: {0}, may-alias: {1,2}]
  %s3 = inlined_call_operand.vmem [shape: f32[8,256], index: 3, kind: output, shape index: {1}]
  %4 = xla_tuple %s2, %s3
  %s5 = sld [smem:[#allocation0]]
  $region26: #{_lambda_.26} parent=0
    _
  %s7 = ssub.s32 1, %s5
  %s8 = scalar_select 0, %s7, %s5
  // Predicated region
  $region2: #{_lambda_.26} parent=0 // pred_check
    _
  $region3: #{_lambda_.26} parent=0 // pred_check_branch
    %10 = sbr.rel (0) target = $region5
  $region4: #{_lambda_.26} parent=0 // pred_region
    _
  $region5: #{_lambda_.26} parent=0 // pred_fallthru
    _
  // Predicated region
  $region6: #{_lambda_.26} parent=0 // pred_check
    _
  $region7: #{_lambda_.26} parent=0 // pred_check_branch
    %12 = sbr.rel (0) target = $region9
  $region8: #{_lambda_.26} parent=0 // pred_region
    _
  $region9: #{_lambda_.26} parent=0 // pred_fallthru
    _
  %v13 = vld [vmem:[%s0] sm:$0xff]
  %v14 = vld [vmem:[%s0 + $0x8] sm:$0xff]
  %v15 = vmul.f32 %v13, 0.9998938
  %v16 = vmul.f32 %v14, 0.9998938
  %v17 = vld [vmem:[%s1] sm:$0xff]
  %v18 = vld [vmem:[%s1 + $0x8] sm:$0xff]
  %v19 = vmul.f32 %v17, 0.0036021168
  %v20 = vmul.f32 %v18, 0.0036021168
  %v21 = vadd.f32 %v15, %v19
  %v22 = vadd.f32 %v16, %v20
  %23 = vst [vmem:[%s2] sm:$0xff] %v21
  %24 = vst [vmem:[%s2 + $0x8] sm:$0xff] %v22
  %v25 = vmul.f32 %v21, 1.9999431
  %v26 = vmul.f32 %v22, 1.9999431
  %27 = vst [vmem:[%s3] sm:$0xff] %v25
  %28 = vst [vmem:[%s3 + $0x8] sm:$0xff] %v26
  // Predicated region
  $region10: #{_lambda_.26} parent=0 // pred_check
    _
  $region11: #{_lambda_.26} parent=0 // pred_check_branch
    %30 = sbr.rel (0) target = $region13
  $region12: #{_lambda_.26} parent=0 // pred_region
    _
  $region13: #{_lambda_.26} parent=0 // pred_fallthru
    _
  // Predicated region
  $region14: #{_lambda_.26} parent=0 // pred_check
    _
  $region15: #{_lambda_.26} parent=0 // pred_check_branch
    %32 = sbr.rel (0) target = $region17
  $region16: #{_lambda_.26} parent=0 // pred_region
    _
  $region17: #{_lambda_.26} parent=0 // pred_fallthru
    _
  // Predicated region
  $region18: #{_lambda_.26} parent=0 // pred_check
    _
  $region19: #{_lambda_.26} parent=0 // pred_check_branch
    %34 = sbr.rel (0) target = $region21
  $region20: #{_lambda_.26} parent=0 // pred_region
    _
  $region21: #{_lambda_.26} parent=0 // pred_fallthru
    _
  // Predicated region
  $region22: #{_lambda_.26} parent=0 // pred_check
    _
  $region23: #{_lambda_.26} parent=0 // pred_check_branch
    %36 = sbr.rel (0) target = $region25
  $region24: #{_lambda_.26} parent=0 // pred_region
    _
  $region25: #{_lambda_.26} parent=0 // pred_fallthru
    _

// kernel: _lambda_.27
$region0: #{_lambda_.27}
  #allocation0 [shape = 'u32[]', space=smem, size = 0x4, offset = 0x4, fixed_abs, tag = 'smem constant byte address 0x4 - core index']
  #allocation1 [shape = 'u32[144,128]{1,0:T(1,128)}', space=vmem, size = 0x12000, scoped, tag = 'internal scratch']
  %s0 = inlined_call_operand.vmem [shape: f32[8,256], index: 0, kind: input, shape index: {}, may-alias: {0,4}]
  %s1 = inlined_call_operand.vmem [shape: f32[8,256], index: 1, kind: input, shape index: {}]
  %s2 = inlined_call_operand.vmem [shape: f32[8,256], index: 2, kind: input, shape index: {}]
  %s3 = inlined_call_operand.vmem [shape: f32[8,256], index: 3, kind: input, shape index: {}]
  %s4 = inlined_call_operand.vmem [shape: f32[8,256], index: 4, kind: output, shape index: {0}, may-alias: {0,4}]
  %s5 = inlined_call_operand.vmem [shape: f32[8,256], index: 5, kind: output, shape index: {1}]
  %6 = xla_tuple %s4, %s5
  %s7 = sld [smem:[#allocation0]]
  $region34: #{_lambda_.27} parent=0
    _
  %s9 = ssub.s32 1, %s7
  %s10 = scalar_select 0, %s9, %s7
  // Predicated region
  $region2: #{_lambda_.27} parent=0 // pred_check
    _
  $region3: #{_lambda_.27} parent=0 // pred_check_branch
    %12 = sbr.rel (0) target = $region5
  $region4: #{_lambda_.27} parent=0 // pred_region
    _
  $region5: #{_lambda_.27} parent=0 // pred_fallthru
    _
  // Predicated region
  $region6: #{_lambda_.27} parent=0 // pred_check
    _
  $region7: #{_lambda_.27} parent=0 // pred_check_branch
    %14 = sbr.rel (0) target = $region9
  $region8: #{_lambda_.27} parent=0 // pred_region
    _
  $region9: #{_lambda_.27} parent=0 // pred_fallthru
    _
  // Predicated region
  $region10: #{_lambda_.27} parent=0 // pred_check
    _
  $region11: #{_lambda_.27} parent=0 // pred_check_branch
    %16 = sbr.rel (0) target = $region13
  $region12: #{_lambda_.27} parent=0 // pred_region
    _
  $region13: #{_lambda_.27} parent=0 // pred_fallthru
    _
  // Predicated region
  $region14: #{_lambda_.27} parent=0 // pred_check
    _
  $region15: #{_lambda_.27} parent=0 // pred_check_branch
    %18 = sbr.rel (0) target = $region17
  $region16: #{_lambda_.27} parent=0 // pred_region
    _
  $region17: #{_lambda_.27} parent=0 // pred_fallthru
    _
  %v19 = vld [vmem:[%s0] sm:$0xff]
  %v20 = vld [vmem:[%s0 + $0x8] sm:$0xff]
  %v21 = vld [vmem:[%s1] sm:$0xff]
  %v22 = vld [vmem:[%s1 + $0x8] sm:$0xff]
  %v23 = vmul.f32 %v21, -0.000108612185
  %v24 = vmul.f32 %v22, -0.000108612185
  %v25 = vadd.f32 %v19, %v23
  %v26 = vadd.f32 %v20, %v24
  %v27 = vld [vmem:[%s2] sm:$0xff]
  %v28 = vld [vmem:[%s2 + $0x8] sm:$0xff]
  %v29 = vmul.f32 %v27, 0.007204812
  %v30 = vmul.f32 %v28, 0.007204812
  %v31 = vadd.f32 %v25, %v29
  %v32 = vadd.f32 %v26, %v30
  %v33 = vld [vmem:[%s3] sm:$0xff]
  %v34 = vld [vmem:[%s3 + $0x8] sm:$0xff]
  %v35 = vmul.f32 %v33, 0.0010947408
  %v36 = vmul.f32 %v34, 0.0010947408
  %v37 = vadd.f32 %v31, %v35
  %v38 = vadd.f32 %v32, %v36
  %39 = vst [vmem:[%s4] sm:$0xff] %v37
  %40 = vst [vmem:[%s4 + $0x8] sm:$0xff] %v38
  %v41 = vmul.f32 %v37, 1.9999951
  %v42 = vmul.f32 %v38, 1.9999951
  %43 = vst [vmem:[%s5] sm:$0xff] %v41
  %44 = vst [vmem:[%s5 + $0x8] sm:$0xff] %v42
  // Predicated region
  $region18: #{_lambda_.27} parent=0 // pred_check
    _
  $region19: #{_lambda_.27} parent=0 // pred_check_branch
    %46 = sbr.rel (0) target = $region21
  $region20: #{_lambda_.27} parent=0 // pred_region
    _
  $region21: #{_lambda_.27} parent=0 // pred_fallthru
    _
  // Predicated region
  $region22: #{_lambda_.27} parent=0 // pred_check
    _
  $region23: #{_lambda_.27} parent=0 // pred_check_branch
    %48 = sbr.rel (0) target = $region25
  $region24: #{_lambda_.27} parent=0 // pred_region
    _
  $region25: #{_lambda_.27} parent=0 // pred_fallthru
    _
  // Predicated region
  $region26: #{_lambda_.27} parent=0 // pred_check
    _
  $region27: #{_lambda_.27} parent=0 // pred_check_branch
    %50 = sbr.rel (0) target = $region29
  $region28: #{_lambda_.27} parent=0 // pred_region
    _
  $region29: #{_lambda_.27} parent=0 // pred_fallthru
    _
  // Predicated region
  $region30: #{_lambda_.27} parent=0 // pred_check
    _
  $region31: #{_lambda_.27} parent=0 // pred_check_branch
    %52 = sbr.rel (0) target = $region33
  $region32: #{_lambda_.27} parent=0 // pred_region
    _
  $region33: #{_lambda_.27} parent=0 // pred_fallthru
    _

// kernel: _lambda_.28
$region0: #{_lambda_.28}
  #allocation0 [shape = 'u32[]', space=smem, size = 0x4, offset = 0x4, fixed_abs, tag = 'smem constant byte address 0x4 - core index']
  #allocation1 [shape = 'u32[144,128]{1,0:T(1,128)}', space=vmem, size = 0x12000, scoped, tag = 'internal scratch']
  %s0 = inlined_call_operand.vmem [shape: f32[8,256], index: 0, kind: input, shape index: {}]
  %s1 = inlined_call_operand.vmem [shape: f32[8,256], index: 1, kind: input, shape index: {}, may-alias: {1,2}]
  %s2 = inlined_call_operand.vmem [shape: f32[8,256], index: 2, kind: output, shape index: {0}, may-alias: {1,2}]
  %s3 = inlined_call_operand.vmem [shape: f32[8,256], index: 3, kind: output, shape index: {1}]
  %4 = xla_tuple %s2, %s3
  %s5 = sld [smem:[#allocation0]]
  $region26: #{_lambda_.28} parent=0
    _
  %s7 = ssub.s32 1, %s5
  %s8 = scalar_select 0, %s7, %s5
  // Predicated region
  $region2: #{_lambda_.28} parent=0 // pred_check
    _
  $region3: #{_lambda_.28} parent=0 // pred_check_branch
    %10 = sbr.rel (0) target = $region5
  $region4: #{_lambda_.28} parent=0 // pred_region
    _
  $region5: #{_lambda_.28} parent=0 // pred_fallthru
    _
  // Predicated region
  $region6: #{_lambda_.28} parent=0 // pred_check
    _
  $region7: #{_lambda_.28} parent=0 // pred_check_branch
    %12 = sbr.rel (0) target = $region9
  $region8: #{_lambda_.28} parent=0 // pred_region
    _
  $region9: #{_lambda_.28} parent=0 // pred_fallthru
    _
  %v13 = vld [vmem:[%s0] sm:$0xff]
  %v14 = vld [vmem:[%s0 + $0x8] sm:$0xff]
  %v15 = vmul.f32 %v13, 0.99999756
  %v16 = vmul.f32 %v14, 0.99999756
  %v17 = vld [vmem:[%s1] sm:$0xff]
  %v18 = vld [vmem:[%s1 + $0x8] sm:$0xff]
  %v19 = vmul.f32 %v17, 0.0005491359
  %v20 = vmul.f32 %v18, 0.0005491359
  %v21 = vadd.f32 %v15, %v19
  %v22 = vadd.f32 %v16, %v20
  %23 = vst [vmem:[%s2] sm:$0xff] %v21
  %24 = vst [vmem:[%s2 + $0x8] sm:$0xff] %v22
  %v25 = vmul.f32 %v21, 1.9999988
  %v26 = vmul.f32 %v22, 1.9999988
  %27 = vst [vmem:[%s3] sm:$0xff] %v25
  %28 = vst [vmem:[%s3 + $0x8] sm:$0xff] %v26
  // Predicated region
  $region10: #{_lambda_.28} parent=0 // pred_check
    _
  $region11: #{_lambda_.28} parent=0 // pred_check_branch
    %30 = sbr.rel (0) target = $region13
  $region12: #{_lambda_.28} parent=0 // pred_region
    _
  $region13: #{_lambda_.28} parent=0 // pred_fallthru
    _
  // Predicated region
  $region14: #{_lambda_.28} parent=0 // pred_check
    _
  $region15: #{_lambda_.28} parent=0 // pred_check_branch
    %32 = sbr.rel (0) target = $region17
  $region16: #{_lambda_.28} parent=0 // pred_region
    _
  $region17: #{_lambda_.28} parent=0 // pred_fallthru
    _
  // Predicated region
  $region18: #{_lambda_.28} parent=0 // pred_check
    _
  $region19: #{_lambda_.28} parent=0 // pred_check_branch
    %34 = sbr.rel (0) target = $region21
  $region20: #{_lambda_.28} parent=0 // pred_region
    _
  $region21: #{_lambda_.28} parent=0 // pred_fallthru
    _
  // Predicated region
  $region22: #{_lambda_.28} parent=0 // pred_check
    _
  $region23: #{_lambda_.28} parent=0 // pred_check_branch
    %36 = sbr.rel (0) target = $region25
  $region24: #{_lambda_.28} parent=0 // pred_region
    _
  $region25: #{_lambda_.28} parent=0 // pred_fallthru
    _

// kernel: _lambda_.29
$region0: #{_lambda_.29}
  #allocation0 [shape = 'u32[]', space=smem, size = 0x4, offset = 0x4, fixed_abs, tag = 'smem constant byte address 0x4 - core index']
  #allocation1 [shape = 'u32[144,128]{1,0:T(1,128)}', space=vmem, size = 0x12000, scoped, tag = 'internal scratch']
  %s0 = inlined_call_operand.vmem [shape: f32[8,256], index: 0, kind: input, shape index: {}, may-alias: {0,4}]
  %s1 = inlined_call_operand.vmem [shape: f32[8,256], index: 1, kind: input, shape index: {}]
  %s2 = inlined_call_operand.vmem [shape: f32[8,256], index: 2, kind: input, shape index: {}]
  %s3 = inlined_call_operand.vmem [shape: f32[8,256], index: 3, kind: input, shape index: {}]
  %s4 = inlined_call_operand.vmem [shape: f32[8,256], index: 4, kind: output, shape index: {0}, may-alias: {0,4}]
  %s5 = inlined_call_operand.vmem [shape: f32[8,256], index: 5, kind: output, shape index: {1}]
  %6 = xla_tuple %s4, %s5
  %s7 = sld [smem:[#allocation0]]
  $region34: #{_lambda_.29} parent=0
    _
  %s9 = ssub.s32 1, %s7
  %s10 = scalar_select 0, %s9, %s7
  // Predicated region
  $region2: #{_lambda_.29} parent=0 // pred_check
    _
  $region3: #{_lambda_.29} parent=0 // pred_check_branch
    %12 = sbr.rel (0) target = $region5
  $region4: #{_lambda_.29} parent=0 // pred_region
    _
  $region5: #{_lambda_.29} parent=0 // pred_fallthru
    _
  // Predicated region
  $region6: #{_lambda_.29} parent=0 // pred_check
    _
  $region7: #{_lambda_.29} parent=0 // pred_check_branch
    %14 = sbr.rel (0) target = $region9
  $region8: #{_lambda_.29} parent=0 // pred_region
    _
  $region9: #{_lambda_.29} parent=0 // pred_fallthru
    _
  // Predicated region
  $region10: #{_lambda_.29} parent=0 // pred_check
    _
  $region11: #{_lambda_.29} parent=0 // pred_check_branch
    %16 = sbr.rel (0) target = $region13
  $region12: #{_lambda_.29} parent=0 // pred_region
    _
  $region13: #{_lambda_.29} parent=0 // pred_fallthru
    _
  // Predicated region
  $region14: #{_lambda_.29} parent=0 // pred_check
    _
  $region15: #{_lambda_.29} parent=0 // pred_check_branch
    %18 = sbr.rel (0) target = $region17
  $region16: #{_lambda_.29} parent=0 // pred_region
    _
  $region17: #{_lambda_.29} parent=0 // pred_fallthru
    _
  %v19 = vld [vmem:[%s0] sm:$0xff]
  %v20 = vld [vmem:[%s0 + $0x8] sm:$0xff]
  %v21 = vld [vmem:[%s1] sm:$0xff]
  %v22 = vld [vmem:[%s1 + $0x8] sm:$0xff]
  %v23 = vmul.f32 %v21, -2.4520843e-06
  %v24 = vmul.f32 %v22, -2.4520843e-06
  %v25 = vadd.f32 %v19, %v23
  %v26 = vadd.f32 %v20, %v24
  %v27 = vld [vmem:[%s2] sm:$0xff]
  %v28 = vld [vmem:[%s2 + $0x8] sm:$0xff]
  %v29 = vmul.f32 %v27, 0.0010982738
  %v30 = vmul.f32 %v28, 0.0010982738
  %v31 = vadd.f32 %v25, %v29
  %v32 = vadd.f32 %v26, %v30
  %v33 = vld [vmem:[%s3] sm:$0xff]
  %v34 = vld [vmem:[%s3 + $0x8] sm:$0xff]
  %v35 = vmul.f32 %v33, 9.959138e-05
  %v36 = vmul.f32 %v34, 9.959138e-05
  %v37 = vadd.f32 %v31, %v35
  %v38 = vadd.f32 %v32, %v36
  %39 = vst [vmem:[%s4] sm:$0xff] %v37
  %40 = vst [vmem:[%s4 + $0x8] sm:$0xff] %v38
  %v41 = vmul.f32 %v37, 2.0
  %v42 = vmul.f32 %v38, 2.0
  %43 = vst [vmem:[%s5] sm:$0xff] %v41
  %44 = vst [vmem:[%s5 + $0x8] sm:$0xff] %v42
  // Predicated region
  $region18: #{_lambda_.29} parent=0 // pred_check
    _
  $region19: #{_lambda_.29} parent=0 // pred_check_branch
    %46 = sbr.rel (0) target = $region21
  $region20: #{_lambda_.29} parent=0 // pred_region
    _
  $region21: #{_lambda_.29} parent=0 // pred_fallthru
    _
  // Predicated region
  $region22: #{_lambda_.29} parent=0 // pred_check
    _
  $region23: #{_lambda_.29} parent=0 // pred_check_branch
    %48 = sbr.rel (0) target = $region25
  $region24: #{_lambda_.29} parent=0 // pred_region
    _
  $region25: #{_lambda_.29} parent=0 // pred_fallthru
    _
  // Predicated region
  $region26: #{_lambda_.29} parent=0 // pred_check
    _
  $region27: #{_lambda_.29} parent=0 // pred_check_branch
    %50 = sbr.rel (0) target = $region29
  $region28: #{_lambda_.29} parent=0 // pred_region
    _
  $region29: #{_lambda_.29} parent=0 // pred_fallthru
    _
  // Predicated region
  $region30: #{_lambda_.29} parent=0 // pred_check
    _
  $region31: #{_lambda_.29} parent=0 // pred_check_branch
    %52 = sbr.rel (0) target = $region33
  $region32: #{_lambda_.29} parent=0 // pred_region
    _
  $region33: #{_lambda_.29} parent=0 // pred_fallthru
    _

// kernel: _lambda_.30
$region0: #{_lambda_.30}
  #allocation0 [shape = 'u32[]', space=smem, size = 0x4, offset = 0x4, fixed_abs, tag = 'smem constant byte address 0x4 - core index']
  #allocation1 [shape = 'u32[144,128]{1,0:T(1,128)}', space=vmem, size = 0x12000, scoped, tag = 'internal scratch']
  %s0 = inlined_call_operand.vmem [shape: f32[8,256], index: 0, kind: input, shape index: {}]
  %s1 = inlined_call_operand.vmem [shape: f32[8,256], index: 1, kind: input, shape index: {}, may-alias: {1,2}]
  %s2 = inlined_call_operand.vmem [shape: f32[8,256], index: 2, kind: output, shape index: {0}, may-alias: {1,2}]
  %s3 = inlined_call_operand.vmem [shape: f32[8,256], index: 3, kind: output, shape index: {1}]
  %4 = xla_tuple %s2, %s3
  %s5 = sld [smem:[#allocation0]]
  $region26: #{_lambda_.30} parent=0
    _
  %s7 = ssub.s32 1, %s5
  %s8 = scalar_select 0, %s7, %s5
  // Predicated region
  $region2: #{_lambda_.30} parent=0 // pred_check
    _
  $region3: #{_lambda_.30} parent=0 // pred_check_branch
    %10 = sbr.rel (0) target = $region5
  $region4: #{_lambda_.30} parent=0 // pred_region
    _
  $region5: #{_lambda_.30} parent=0 // pred_fallthru
    _
  // Predicated region
  $region6: #{_lambda_.30} parent=0 // pred_check
    _
  $region7: #{_lambda_.30} parent=0 // pred_check_branch
    %12 = sbr.rel (0) target = $region9
  $region8: #{_lambda_.30} parent=0 // pred_region
    _
  $region9: #{_lambda_.30} parent=0 // pred_fallthru
    _
  %v13 = vld [vmem:[%s0] sm:$0xff]
  %v14 = vld [vmem:[%s0 + $0x8] sm:$0xff]
  %v15 = vld [vmem:[%s1] sm:$0xff]
  %v16 = vld [vmem:[%s1 + $0x8] sm:$0xff]
  %v17 = vmul.f32 %v15, 5e-05
  %v18 = vmul.f32 %v16, 5e-05
  %v19 = vadd.f32 %v13, %v17
  %v20 = vadd.f32 %v14, %v18
  %21 = vst [vmem:[%s2] sm:$0xff] %v19
  %22 = vst [vmem:[%s2 + $0x8] sm:$0xff] %v20
  %v23 = vmul.f32 %v19, 2.0
  %v24 = vmul.f32 %v20, 2.0
  %25 = vst [vmem:[%s3] sm:$0xff] %v23
  %26 = vst [vmem:[%s3 + $0x8] sm:$0xff] %v24
  // Predicated region
  $region10: #{_lambda_.30} parent=0 // pred_check
    _
  $region11: #{_lambda_.30} parent=0 // pred_check_branch
    %28 = sbr.rel (0) target = $region13
  $region12: #{_lambda_.30} parent=0 // pred_region
    _
  $region13: #{_lambda_.30} parent=0 // pred_fallthru
    _
  // Predicated region
  $region14: #{_lambda_.30} parent=0 // pred_check
    _
  $region15: #{_lambda_.30} parent=0 // pred_check_branch
    %30 = sbr.rel (0) target = $region17
  $region16: #{_lambda_.30} parent=0 // pred_region
    _
  $region17: #{_lambda_.30} parent=0 // pred_fallthru
    _
  // Predicated region
  $region18: #{_lambda_.30} parent=0 // pred_check
    _
  $region19: #{_lambda_.30} parent=0 // pred_check_branch
    %32 = sbr.rel (0) target = $region21
  $region20: #{_lambda_.30} parent=0 // pred_region
    _
  $region21: #{_lambda_.30} parent=0 // pred_fallthru
    _
  // Predicated region
  $region22: #{_lambda_.30} parent=0 // pred_check
    _
  $region23: #{_lambda_.30} parent=0 // pred_check_branch
    %34 = sbr.rel (0) target = $region25
  $region24: #{_lambda_.30} parent=0 // pred_region
    _
  $region25: #{_lambda_.30} parent=0 // pred_fallthru
    _

// kernel: _lambda_.31
$region0: #{_lambda_.31}
  #allocation0 [shape = 'u32[]', space=smem, size = 0x4, offset = 0x4, fixed_abs, tag = 'smem constant byte address 0x4 - core index']
  #allocation1 [shape = 'u32[144,128]{1,0:T(1,128)}', space=vmem, size = 0x12000, scoped, tag = 'internal scratch']
  %s0 = inlined_call_operand.vmem [shape: f32[8,256], index: 0, kind: input, shape index: {}, may-alias: {0,4}]
  %s1 = inlined_call_operand.vmem [shape: f32[8,256], index: 1, kind: input, shape index: {}]
  %s2 = inlined_call_operand.vmem [shape: f32[8,256], index: 2, kind: input, shape index: {}]
  %s3 = inlined_call_operand.vmem [shape: f32[8,256], index: 3, kind: input, shape index: {}]
  %s4 = inlined_call_operand.vmem [shape: f32[8,256], index: 4, kind: output, shape index: {}, may-alias: {0,4}]
  %s5 = sld [smem:[#allocation0]]
  $region26: #{_lambda_.31} parent=0
    _
  %s7 = ssub.s32 1, %s5
  %s8 = scalar_select 0, %s7, %s5
  // Predicated region
  $region2: #{_lambda_.31} parent=0 // pred_check
    _
  $region3: #{_lambda_.31} parent=0 // pred_check_branch
    %10 = sbr.rel (0) target = $region5
  $region4: #{_lambda_.31} parent=0 // pred_region
    _
  $region5: #{_lambda_.31} parent=0 // pred_fallthru
    _
  // Predicated region
  $region6: #{_lambda_.31} parent=0 // pred_check
    _
  $region7: #{_lambda_.31} parent=0 // pred_check_branch
    %12 = sbr.rel (0) target = $region9
  $region8: #{_lambda_.31} parent=0 // pred_region
    _
  $region9: #{_lambda_.31} parent=0 // pred_fallthru
    _
  // Predicated region
  $region10: #{_lambda_.31} parent=0 // pred_check
    _
  $region11: #{_lambda_.31} parent=0 // pred_check_branch
    %14 = sbr.rel (0) target = $region13
  $region12: #{_lambda_.31} parent=0 // pred_region
    _
  $region13: #{_lambda_.31} parent=0 // pred_fallthru
    _
  // Predicated region
  $region14: #{_lambda_.31} parent=0 // pred_check
    _
  $region15: #{_lambda_.31} parent=0 // pred_check_branch
    %16 = sbr.rel (0) target = $region17
  $region16: #{_lambda_.31} parent=0 // pred_region
    _
  $region17: #{_lambda_.31} parent=0 // pred_fallthru
    _
  %v17 = vld [vmem:[%s0] sm:$0xff]
  %v18 = vld [vmem:[%s0 + $0x8] sm:$0xff]
  %v19 = vld [vmem:[%s1] sm:$0xff]
  %v20 = vld [vmem:[%s1 + $0x8] sm:$0xff]
  %v21 = vmul.f32 %v19, -2e-08
  %v22 = vmul.f32 %v20, -2e-08
  %v23 = vadd.f32 %v17, %v21
  %v24 = vadd.f32 %v18, %v22
  %v25 = vld [vmem:[%s2] sm:$0xff]
  %v26 = vld [vmem:[%s2 + $0x8] sm:$0xff]
  %v27 = vmul.f32 %v25, 0.0001
  %v28 = vmul.f32 %v26, 0.0001
  %v29 = vadd.f32 %v23, %v27
  %v30 = vadd.f32 %v24, %v28
  %v31 = vld [vmem:[%s3] sm:$0xff]
  %v32 = vld [vmem:[%s3 + $0x8] sm:$0xff]
  %v33 = vmul.f32 %v31, 0.0
  %v34 = vmul.f32 %v32, 0.0
  %v35 = vadd.f32 %v29, %v33
  %v36 = vadd.f32 %v30, %v34
  %37 = vst [vmem:[%s4] sm:$0xff] %v35
  %38 = vst [vmem:[%s4 + $0x8] sm:$0xff] %v36
  // Predicated region
  $region18: #{_lambda_.31} parent=0 // pred_check
    _
  $region19: #{_lambda_.31} parent=0 // pred_check_branch
    %40 = sbr.rel (0) target = $region21
  $region20: #{_lambda_.31} parent=0 // pred_region
    _
  $region21: #{_lambda_.31} parent=0 // pred_fallthru
    _
  // Predicated region
  $region22: #{_lambda_.31} parent=0 // pred_check
    _
  $region23: #{_lambda_.31} parent=0 // pred_check_branch
    %42 = sbr.rel (0) target = $region25
  $region24: #{_lambda_.31} parent=0 // pred_region
    _
  $region25: #{_lambda_.31} parent=0 // pred_fallthru
    _

</llo_original>
